<compile_context>
chip_gen: v7x
topology: tpu7x:2x2x1
jax: 0.10.0
libtpu: 0.0.40
codegen_flags: <defaults>
</compile_context>

<pallas_src>
import math

import jax
import jax.numpy as jnp
from jax import lax
from jax.experimental import pallas as pl
from jax.experimental.pallas import tpu as pltpu


# ----------------------------------------------------------------------------- kernel ----
def _mfe_kernel(x_ref, wconv_ref, bconv_ref, wih_ref, whh_ref, blstm_ref, o_ref):
    """x:(T2, B, C) time-major input,  wconv:(K, C, H),  bconv:(1, H),
       wih/whh:(H, 4H) gate-stacked (i|f|g|o),  blstm:(1, 4H)  ->  o:(B, H)."""
    T2, B, C = x_ref.shape
    K, _, H = wconv_ref.shape
    Tout = T2 - K + 1
    H4 = wih_ref.shape[1]

    # --- Conv1d ('valid') as per-tap matmul accumulation, rows are time-major (t*B + b) ---
    x = x_ref[...]                                   # (T2, B, C)
    wconv = wconv_ref[...]                           # (K, C, H)
    acc = jnp.zeros((Tout * B, H), jnp.float32)
    for k in range(K):                               # static, fully unrolled; taps independent
        xk = x[k:k + Tout].reshape(Tout * B, C)      # free leading-dim collapse
        acc = acc + jnp.dot(xk, wconv[k], preferred_element_type=jnp.float32)
    feat = jnp.maximum(acc + bconv_ref[...], 0.0)    # (Tout*B, H)  CNN output (ReLU)

    # --- Hoisted LSTM input projection: all gates, all timesteps, one matmul --------------
    xproj = (jnp.dot(feat, wih_ref[...], preferred_element_type=jnp.float32)
             + blstm_ref[...]).reshape(Tout, B, H4)  # (Tout, B, 4H)

    # --- LSTM recurrence (PyTorch gate order i, f, g, o); only final h is needed ----------
    whh = whh_ref[...]                               # (H, 4H) kept in vregs across the loop
    h = jnp.zeros((B, H), jnp.float32)
    c = jnp.zeros((B, H), jnp.float32)
    for t in range(Tout):                            # fully unrolled short recurrence
        gates = xproj[t] + jnp.dot(h, whh, preferred_element_type=jnp.float32)  # (B, 4H)
        i_g = jax.nn.sigmoid(gates[:, 0 * H:1 * H])
        f_g = jax.nn.sigmoid(gates[:, 1 * H:2 * H])
        g_g = jnp.tanh(gates[:, 2 * H:3 * H])
        o_g = jax.nn.sigmoid(gates[:, 3 * H:4 * H])
        c = f_g * c + i_g * g_g
        h = o_g * jnp.tanh(c)

    o_ref[...] = h


# ---------------------------------------------------------------------------- wrapper ----
def modality_feature_extractor(x, params):
    wconv, bconv, wih, whh, blstm = params
    N, T1, T2, C = x.shape
    B = N * T1
    KC, H = wconv.shape
    K = KC // C

    # Time-major input (T2, B, C): cheap single transpose, no K-fold im2col duplication.
    x_tm = x.reshape(B, T2, C).transpose(1, 0, 2).astype(jnp.float32)

    # Gate-stacked LSTM weights: columns ordered i|f|g|o.
    wconv_k = wconv.reshape(K, C, H).astype(jnp.float32)          # row index was k*C + c
    wih_s = wih.transpose(1, 0, 2).reshape(H, 4 * H).astype(jnp.float32)
    whh_s = whh.transpose(1, 0, 2).reshape(H, 4 * H).astype(jnp.float32)
    b_s = blstm.transpose(1, 0, 2).reshape(1, 4 * H).astype(jnp.float32)

    vmem = lambda: pl.BlockSpec(memory_space=pltpu.MemorySpace.VMEM)
    h_n = pl.pallas_call(
        _mfe_kernel,
        out_shape=jax.ShapeDtypeStruct((B, H), jnp.float32),
        in_specs=[vmem() for _ in range(6)],
        out_specs=vmem(),
    )(x_tm, wconv_k, bconv.astype(jnp.float32), wih_s, whh_s, b_s)
    return h_n.reshape(N, T1, H)


# ------------------------------------------------------------------- params / reference --
def init_params(key, d, h_dim=12, kernel_size=10):
    k1, k2, k3, k4, k5, k6 = jax.random.split(key, 6)
    cs = 1.0 / math.sqrt(d * kernel_size)
    wconv = jax.random.uniform(k1, (kernel_size * d, h_dim), jnp.float32, -cs, cs)
    bconv = jax.random.uniform(k2, (1, h_dim), jnp.float32, -cs, cs)
    ls = 1.0 / math.sqrt(h_dim)
    wih = jax.random.uniform(k3, (4, h_dim, h_dim), jnp.float32, -ls, ls)
    whh = jax.random.uniform(k4, (4, h_dim, h_dim), jnp.float32, -ls, ls)
    blstm = (jax.random.uniform(k5, (4, 1, h_dim), jnp.float32, -ls, ls)
             + jax.random.uniform(k6, (4, 1, h_dim), jnp.float32, -ls, ls))
    return wconv, bconv, wih, whh, blstm


def reference(x, params):
    """Pure-JAX reference matching the PyTorch forward semantics."""
    wconv, bconv, wih, whh, blstm = params
    N, T1, T2, C = x.shape
    B = N * T1
    KC, H = wconv.shape
    K = KC // C
    Tout = T2 - K + 1
    xb = x.reshape(B, T2, C).astype(jnp.float32)

    feat = lax.conv_general_dilated(
        xb, wconv.reshape(K, C, H), window_strides=(1,), padding="VALID",
        dimension_numbers=("NWC", "WIO", "NWC")) + bconv[None]
    feat = jnp.maximum(feat, 0.0)                      # (B, Tout, H)

    h = jnp.zeros((B, H), jnp.float32)
    c = jnp.zeros((B, H), jnp.float32)
    for t in range(Tout):
        xt = feat[:, t, :]
        i = jax.nn.sigmoid(xt @ wih[0] + h @ whh[0] + blstm[0])
        f = jax.nn.sigmoid(xt @ wih[1] + h @ whh[1] + blstm[1])
        g = jnp.tanh(xt @ wih[2] + h @ whh[2] + blstm[2])
        o = jax.nn.sigmoid(xt @ wih[3] + h @ whh[3] + blstm[3])
        c = f * c + i * g
        h = o * jnp.tanh(c)
    return h.reshape(N, T1, H)


# ------------------------------------------------------------------------------- main ----
if __name__ == "__main__":
    key = jax.random.PRNGKey(0)
    N, T1, T2, C = 2, 4, 16, 4          # x: (N, T1, T2, C) with C == d
    h_dim, kernel_size = 12, 10         # module defaults -> Tout = 7, B = 8

    kx, kp = jax.random.split(key)
    x = jax.random.normal(kx, (N, T1, T2, C), jnp.float32)
    params = init_params(kp, C, h_dim=h_dim, kernel_size=kernel_size)

    out = jax.block_until_ready(modality_feature_extractor(x, params))
    ref = jax.block_until_ready(reference(x, params))

    assert out.shape == (N, T1, h_dim), out.shape
    assert bool(jnp.all(jnp.isfinite(out)))
    assert bool(jnp.allclose(out, ref, atol=5e-3, rtol=5e-3)), "mismatch vs JAX reference"
    print("KERNEL_OK")
</pallas_src>

<mosaic_0001>
module attributes {stable_mosaic.version = 11 : i64} {
  func.func @_mfe_kernel(%arg0: memref<16x8x4xf32, #tpu.memory_space<vmem>>, %arg1: memref<10x4x12xf32, #tpu.memory_space<vmem>>, %arg2: memref<1x12xf32, #tpu.memory_space<vmem>>, %arg3: memref<12x48xf32, #tpu.memory_space<vmem>>, %arg4: memref<12x48xf32, #tpu.memory_space<vmem>>, %arg5: memref<1x48xf32, #tpu.memory_space<vmem>>, %arg6: memref<8x12xf32, #tpu.memory_space<vmem>>) attributes {dimension_semantics = [], scalar_prefetch = 0 : i64, scratch_operands = 0 : i64, tpu.core_type = #tpu.core_type<tc>} {
    %c0 = arith.constant 0 : index
    %c0_0 = arith.constant 0 : index
    %c0_1 = arith.constant 0 : index
    %0 = vector.load %arg0[%c0, %c0_0, %c0_1] : memref<16x8x4xf32, #tpu.memory_space<vmem>>, vector<16x8x4xf32>
    %c0_2 = arith.constant 0 : index
    %c0_3 = arith.constant 0 : index
    %c0_4 = arith.constant 0 : index
    %1 = vector.load %arg1[%c0_2, %c0_3, %c0_4] : memref<10x4x12xf32, #tpu.memory_space<vmem>>, vector<10x4x12xf32>
    %cst = arith.constant 0.000000e+00 : f32
    %2 = vector.broadcast %cst : f32 to vector<56x12xf32>
    %3 = vector.extract_strided_slice %0 {offsets = [0, 0, 0], sizes = [7, 8, 4], strides = [1, 1, 1]} : vector<16x8x4xf32> to vector<7x8x4xf32>
    %4 = vector.shape_cast %3 : vector<7x8x4xf32> to vector<56x4xf32>
    %5 = vector.extract_strided_slice %1 {offsets = [0, 0, 0], sizes = [1, 4, 12], strides = [1, 1, 1]} : vector<10x4x12xf32> to vector<1x4x12xf32>
    %6 = vector.shape_cast %5 : vector<1x4x12xf32> to vector<4x12xf32>
    %cst_5 = arith.constant dense<0.000000e+00> : vector<56x12xf32>
    %7 = tpu.matmul %4, %6, %cst_5 {dimension_numbers = #tpu.dot_dimension_numbers<[1], [0], [0], [1], [0, 0, 1, 1], [], []>} : vector<56x4xf32>, vector<4x12xf32>, vector<56x12xf32> -> vector<56x12xf32>
    %8 = arith.addf %2, %7 : vector<56x12xf32>
    %9 = vector.extract_strided_slice %0 {offsets = [1, 0, 0], sizes = [7, 8, 4], strides = [1, 1, 1]} : vector<16x8x4xf32> to vector<7x8x4xf32>
    %10 = vector.shape_cast %9 : vector<7x8x4xf32> to vector<56x4xf32>
    %11 = vector.extract_strided_slice %1 {offsets = [1, 0, 0], sizes = [1, 4, 12], strides = [1, 1, 1]} : vector<10x4x12xf32> to vector<1x4x12xf32>
    %12 = vector.shape_cast %11 : vector<1x4x12xf32> to vector<4x12xf32>
    %cst_6 = arith.constant dense<0.000000e+00> : vector<56x12xf32>
    %13 = tpu.matmul %10, %12, %cst_6 {dimension_numbers = #tpu.dot_dimension_numbers<[1], [0], [0], [1], [0, 0, 1, 1], [], []>} : vector<56x4xf32>, vector<4x12xf32>, vector<56x12xf32> -> vector<56x12xf32>
    %14 = arith.addf %8, %13 : vector<56x12xf32>
    %15 = vector.extract_strided_slice %0 {offsets = [2, 0, 0], sizes = [7, 8, 4], strides = [1, 1, 1]} : vector<16x8x4xf32> to vector<7x8x4xf32>
    %16 = vector.shape_cast %15 : vector<7x8x4xf32> to vector<56x4xf32>
    %17 = vector.extract_strided_slice %1 {offsets = [2, 0, 0], sizes = [1, 4, 12], strides = [1, 1, 1]} : vector<10x4x12xf32> to vector<1x4x12xf32>
    %18 = vector.shape_cast %17 : vector<1x4x12xf32> to vector<4x12xf32>
    %cst_7 = arith.constant dense<0.000000e+00> : vector<56x12xf32>
    %19 = tpu.matmul %16, %18, %cst_7 {dimension_numbers = #tpu.dot_dimension_numbers<[1], [0], [0], [1], [0, 0, 1, 1], [], []>} : vector<56x4xf32>, vector<4x12xf32>, vector<56x12xf32> -> vector<56x12xf32>
    %20 = arith.addf %14, %19 : vector<56x12xf32>
    %21 = vector.extract_strided_slice %0 {offsets = [3, 0, 0], sizes = [7, 8, 4], strides = [1, 1, 1]} : vector<16x8x4xf32> to vector<7x8x4xf32>
    %22 = vector.shape_cast %21 : vector<7x8x4xf32> to vector<56x4xf32>
    %23 = vector.extract_strided_slice %1 {offsets = [3, 0, 0], sizes = [1, 4, 12], strides = [1, 1, 1]} : vector<10x4x12xf32> to vector<1x4x12xf32>
    %24 = vector.shape_cast %23 : vector<1x4x12xf32> to vector<4x12xf32>
    %cst_8 = arith.constant dense<0.000000e+00> : vector<56x12xf32>
    %25 = tpu.matmul %22, %24, %cst_8 {dimension_numbers = #tpu.dot_dimension_numbers<[1], [0], [0], [1], [0, 0, 1, 1], [], []>} : vector<56x4xf32>, vector<4x12xf32>, vector<56x12xf32> -> vector<56x12xf32>
    %26 = arith.addf %20, %25 : vector<56x12xf32>
    %27 = vector.extract_strided_slice %0 {offsets = [4, 0, 0], sizes = [7, 8, 4], strides = [1, 1, 1]} : vector<16x8x4xf32> to vector<7x8x4xf32>
    %28 = vector.shape_cast %27 : vector<7x8x4xf32> to vector<56x4xf32>
    %29 = vector.extract_strided_slice %1 {offsets = [4, 0, 0], sizes = [1, 4, 12], strides = [1, 1, 1]} : vector<10x4x12xf32> to vector<1x4x12xf32>
    %30 = vector.shape_cast %29 : vector<1x4x12xf32> to vector<4x12xf32>
    %cst_9 = arith.constant dense<0.000000e+00> : vector<56x12xf32>
    %31 = tpu.matmul %28, %30, %cst_9 {dimension_numbers = #tpu.dot_dimension_numbers<[1], [0], [0], [1], [0, 0, 1, 1], [], []>} : vector<56x4xf32>, vector<4x12xf32>, vector<56x12xf32> -> vector<56x12xf32>
    %32 = arith.addf %26, %31 : vector<56x12xf32>
    %33 = vector.extract_strided_slice %0 {offsets = [5, 0, 0], sizes = [7, 8, 4], strides = [1, 1, 1]} : vector<16x8x4xf32> to vector<7x8x4xf32>
    %34 = vector.shape_cast %33 : vector<7x8x4xf32> to vector<56x4xf32>
    %35 = vector.extract_strided_slice %1 {offsets = [5, 0, 0], sizes = [1, 4, 12], strides = [1, 1, 1]} : vector<10x4x12xf32> to vector<1x4x12xf32>
    %36 = vector.shape_cast %35 : vector<1x4x12xf32> to vector<4x12xf32>
    %cst_10 = arith.constant dense<0.000000e+00> : vector<56x12xf32>
    %37 = tpu.matmul %34, %36, %cst_10 {dimension_numbers = #tpu.dot_dimension_numbers<[1], [0], [0], [1], [0, 0, 1, 1], [], []>} : vector<56x4xf32>, vector<4x12xf32>, vector<56x12xf32> -> vector<56x12xf32>
    %38 = arith.addf %32, %37 : vector<56x12xf32>
    %39 = vector.extract_strided_slice %0 {offsets = [6, 0, 0], sizes = [7, 8, 4], strides = [1, 1, 1]} : vector<16x8x4xf32> to vector<7x8x4xf32>
    %40 = vector.shape_cast %39 : vector<7x8x4xf32> to vector<56x4xf32>
    %41 = vector.extract_strided_slice %1 {offsets = [6, 0, 0], sizes = [1, 4, 12], strides = [1, 1, 1]} : vector<10x4x12xf32> to vector<1x4x12xf32>
    %42 = vector.shape_cast %41 : vector<1x4x12xf32> to vector<4x12xf32>
    %cst_11 = arith.constant dense<0.000000e+00> : vector<56x12xf32>
    %43 = tpu.matmul %40, %42, %cst_11 {dimension_numbers = #tpu.dot_dimension_numbers<[1], [0], [0], [1], [0, 0, 1, 1], [], []>} : vector<56x4xf32>, vector<4x12xf32>, vector<56x12xf32> -> vector<56x12xf32>
    %44 = arith.addf %38, %43 : vector<56x12xf32>
    %45 = vector.extract_strided_slice %0 {offsets = [7, 0, 0], sizes = [7, 8, 4], strides = [1, 1, 1]} : vector<16x8x4xf32> to vector<7x8x4xf32>
    %46 = vector.shape_cast %45 : vector<7x8x4xf32> to vector<56x4xf32>
    %47 = vector.extract_strided_slice %1 {offsets = [7, 0, 0], sizes = [1, 4, 12], strides = [1, 1, 1]} : vector<10x4x12xf32> to vector<1x4x12xf32>
    %48 = vector.shape_cast %47 : vector<1x4x12xf32> to vector<4x12xf32>
    %cst_12 = arith.constant dense<0.000000e+00> : vector<56x12xf32>
    %49 = tpu.matmul %46, %48, %cst_12 {dimension_numbers = #tpu.dot_dimension_numbers<[1], [0], [0], [1], [0, 0, 1, 1], [], []>} : vector<56x4xf32>, vector<4x12xf32>, vector<56x12xf32> -> vector<56x12xf32>
    %50 = arith.addf %44, %49 : vector<56x12xf32>
    %51 = vector.extract_strided_slice %0 {offsets = [8, 0, 0], sizes = [7, 8, 4], strides = [1, 1, 1]} : vector<16x8x4xf32> to vector<7x8x4xf32>
    %52 = vector.shape_cast %51 : vector<7x8x4xf32> to vector<56x4xf32>
    %53 = vector.extract_strided_slice %1 {offsets = [8, 0, 0], sizes = [1, 4, 12], strides = [1, 1, 1]} : vector<10x4x12xf32> to vector<1x4x12xf32>
    %54 = vector.shape_cast %53 : vector<1x4x12xf32> to vector<4x12xf32>
    %cst_13 = arith.constant dense<0.000000e+00> : vector<56x12xf32>
    %55 = tpu.matmul %52, %54, %cst_13 {dimension_numbers = #tpu.dot_dimension_numbers<[1], [0], [0], [1], [0, 0, 1, 1], [], []>} : vector<56x4xf32>, vector<4x12xf32>, vector<56x12xf32> -> vector<56x12xf32>
    %56 = arith.addf %50, %55 : vector<56x12xf32>
    %57 = vector.extract_strided_slice %0 {offsets = [9, 0, 0], sizes = [7, 8, 4], strides = [1, 1, 1]} : vector<16x8x4xf32> to vector<7x8x4xf32>
    %58 = vector.shape_cast %57 : vector<7x8x4xf32> to vector<56x4xf32>
    %59 = vector.extract_strided_slice %1 {offsets = [9, 0, 0], sizes = [1, 4, 12], strides = [1, 1, 1]} : vector<10x4x12xf32> to vector<1x4x12xf32>
    %60 = vector.shape_cast %59 : vector<1x4x12xf32> to vector<4x12xf32>
    %cst_14 = arith.constant dense<0.000000e+00> : vector<56x12xf32>
    %61 = tpu.matmul %58, %60, %cst_14 {dimension_numbers = #tpu.dot_dimension_numbers<[1], [0], [0], [1], [0, 0, 1, 1], [], []>} : vector<56x4xf32>, vector<4x12xf32>, vector<56x12xf32> -> vector<56x12xf32>
    %62 = arith.addf %56, %61 : vector<56x12xf32>
    %c0_15 = arith.constant 0 : index
    %c0_16 = arith.constant 0 : index
    %63 = vector.load %arg2[%c0_15, %c0_16] : memref<1x12xf32, #tpu.memory_space<vmem>>, vector<1x12xf32>
    %64 = vector.broadcast %63 : vector<1x12xf32> to vector<56x12xf32>
    %65 = arith.addf %62, %64 : vector<56x12xf32>
    %cst_17 = arith.constant 0.000000e+00 : f32
    %66 = vector.broadcast %cst_17 : f32 to vector<56x12xf32>
    %67 = arith.maximumf %65, %66 : vector<56x12xf32>
    %c0_18 = arith.constant 0 : index
    %c0_19 = arith.constant 0 : index
    %68 = vector.load %arg3[%c0_18, %c0_19] : memref<12x48xf32, #tpu.memory_space<vmem>>, vector<12x48xf32>
    %cst_20 = arith.constant dense<0.000000e+00> : vector<56x48xf32>
    %69 = tpu.matmul %67, %68, %cst_20 {dimension_numbers = #tpu.dot_dimension_numbers<[1], [0], [0], [1], [0, 0, 1, 1], [], []>} : vector<56x12xf32>, vector<12x48xf32>, vector<56x48xf32> -> vector<56x48xf32>
    %c0_21 = arith.constant 0 : index
    %c0_22 = arith.constant 0 : index
    %70 = vector.load %arg5[%c0_21, %c0_22] : memref<1x48xf32, #tpu.memory_space<vmem>>, vector<1x48xf32>
    %71 = vector.broadcast %70 : vector<1x48xf32> to vector<56x48xf32>
    %72 = arith.addf %69, %71 : vector<56x48xf32>
    %73 = vector.shape_cast %72 : vector<56x48xf32> to vector<7x8x48xf32>
    %c0_23 = arith.constant 0 : index
    %c0_24 = arith.constant 0 : index
    %74 = vector.load %arg4[%c0_23, %c0_24] : memref<12x48xf32, #tpu.memory_space<vmem>>, vector<12x48xf32>
    %cst_25 = arith.constant 0.000000e+00 : f32
    %75 = vector.broadcast %cst_25 : f32 to vector<8x12xf32>
    %cst_26 = arith.constant 0.000000e+00 : f32
    %76 = vector.broadcast %cst_26 : f32 to vector<8x12xf32>
    %77 = vector.extract_strided_slice %73 {offsets = [0, 0, 0], sizes = [1, 8, 48], strides = [1, 1, 1]} : vector<7x8x48xf32> to vector<1x8x48xf32>
    %78 = vector.shape_cast %77 : vector<1x8x48xf32> to vector<8x48xf32>
    %cst_27 = arith.constant dense<0.000000e+00> : vector<8x48xf32>
    %79 = tpu.matmul %75, %74, %cst_27 {dimension_numbers = #tpu.dot_dimension_numbers<[1], [0], [0], [1], [0, 0, 1, 1], [], []>} : vector<8x12xf32>, vector<12x48xf32>, vector<8x48xf32> -> vector<8x48xf32>
    %80 = arith.addf %78, %79 : vector<8x48xf32>
    %81 = vector.extract_strided_slice %80 {offsets = [0, 0], sizes = [8, 12], strides = [1, 1]} : vector<8x48xf32> to vector<8x12xf32>
    %82 = arith.negf %81 : vector<8x12xf32>
    %83 = math.exp %82 : vector<8x12xf32>
    %cst_28 = arith.constant 1.000000e+00 : f32
    %84 = vector.broadcast %cst_28 : f32 to vector<8x12xf32>
    %85 = arith.addf %84, %83 : vector<8x12xf32>
    %86 = arith.divf %84, %85 : vector<8x12xf32>
    %87 = vector.extract_strided_slice %80 {offsets = [0, 12], sizes = [8, 12], strides = [1, 1]} : vector<8x48xf32> to vector<8x12xf32>
    %88 = arith.negf %87 : vector<8x12xf32>
    %89 = math.exp %88 : vector<8x12xf32>
    %cst_29 = arith.constant 1.000000e+00 : f32
    %90 = vector.broadcast %cst_29 : f32 to vector<8x12xf32>
    %91 = arith.addf %90, %89 : vector<8x12xf32>
    %92 = arith.divf %90, %91 : vector<8x12xf32>
    %93 = vector.extract_strided_slice %80 {offsets = [0, 24], sizes = [8, 12], strides = [1, 1]} : vector<8x48xf32> to vector<8x12xf32>
    %94 = math.tanh %93 : vector<8x12xf32>
    %95 = vector.extract_strided_slice %80 {offsets = [0, 36], sizes = [8, 12], strides = [1, 1]} : vector<8x48xf32> to vector<8x12xf32>
    %96 = arith.negf %95 : vector<8x12xf32>
    %97 = math.exp %96 : vector<8x12xf32>
    %cst_30 = arith.constant 1.000000e+00 : f32
    %98 = vector.broadcast %cst_30 : f32 to vector<8x12xf32>
    %99 = arith.addf %98, %97 : vector<8x12xf32>
    %100 = arith.divf %98, %99 : vector<8x12xf32>
    %101 = arith.mulf %92, %76 : vector<8x12xf32>
    %102 = arith.mulf %86, %94 : vector<8x12xf32>
    %103 = arith.addf %101, %102 : vector<8x12xf32>
    %104 = math.tanh %103 : vector<8x12xf32>
    %105 = arith.mulf %100, %104 : vector<8x12xf32>
    %106 = vector.extract_strided_slice %73 {offsets = [1, 0, 0], sizes = [1, 8, 48], strides = [1, 1, 1]} : vector<7x8x48xf32> to vector<1x8x48xf32>
    %107 = vector.shape_cast %106 : vector<1x8x48xf32> to vector<8x48xf32>
    %cst_31 = arith.constant dense<0.000000e+00> : vector<8x48xf32>
    %108 = tpu.matmul %105, %74, %cst_31 {dimension_numbers = #tpu.dot_dimension_numbers<[1], [0], [0], [1], [0, 0, 1, 1], [], []>} : vector<8x12xf32>, vector<12x48xf32>, vector<8x48xf32> -> vector<8x48xf32>
    %109 = arith.addf %107, %108 : vector<8x48xf32>
    %110 = vector.extract_strided_slice %109 {offsets = [0, 0], sizes = [8, 12], strides = [1, 1]} : vector<8x48xf32> to vector<8x12xf32>
    %111 = arith.negf %110 : vector<8x12xf32>
    %112 = math.exp %111 : vector<8x12xf32>
    %cst_32 = arith.constant 1.000000e+00 : f32
    %113 = vector.broadcast %cst_32 : f32 to vector<8x12xf32>
    %114 = arith.addf %113, %112 : vector<8x12xf32>
    %115 = arith.divf %113, %114 : vector<8x12xf32>
    %116 = vector.extract_strided_slice %109 {offsets = [0, 12], sizes = [8, 12], strides = [1, 1]} : vector<8x48xf32> to vector<8x12xf32>
    %117 = arith.negf %116 : vector<8x12xf32>
    %118 = math.exp %117 : vector<8x12xf32>
    %cst_33 = arith.constant 1.000000e+00 : f32
    %119 = vector.broadcast %cst_33 : f32 to vector<8x12xf32>
    %120 = arith.addf %119, %118 : vector<8x12xf32>
    %121 = arith.divf %119, %120 : vector<8x12xf32>
    %122 = vector.extract_strided_slice %109 {offsets = [0, 24], sizes = [8, 12], strides = [1, 1]} : vector<8x48xf32> to vector<8x12xf32>
    %123 = math.tanh %122 : vector<8x12xf32>
    %124 = vector.extract_strided_slice %109 {offsets = [0, 36], sizes = [8, 12], strides = [1, 1]} : vector<8x48xf32> to vector<8x12xf32>
    %125 = arith.negf %124 : vector<8x12xf32>
    %126 = math.exp %125 : vector<8x12xf32>
    %cst_34 = arith.constant 1.000000e+00 : f32
    %127 = vector.broadcast %cst_34 : f32 to vector<8x12xf32>
    %128 = arith.addf %127, %126 : vector<8x12xf32>
    %129 = arith.divf %127, %128 : vector<8x12xf32>
    %130 = arith.mulf %121, %103 : vector<8x12xf32>
    %131 = arith.mulf %115, %123 : vector<8x12xf32>
    %132 = arith.addf %130, %131 : vector<8x12xf32>
    %133 = math.tanh %132 : vector<8x12xf32>
    %134 = arith.mulf %129, %133 : vector<8x12xf32>
    %135 = vector.extract_strided_slice %73 {offsets = [2, 0, 0], sizes = [1, 8, 48], strides = [1, 1, 1]} : vector<7x8x48xf32> to vector<1x8x48xf32>
    %136 = vector.shape_cast %135 : vector<1x8x48xf32> to vector<8x48xf32>
    %cst_35 = arith.constant dense<0.000000e+00> : vector<8x48xf32>
    %137 = tpu.matmul %134, %74, %cst_35 {dimension_numbers = #tpu.dot_dimension_numbers<[1], [0], [0], [1], [0, 0, 1, 1], [], []>} : vector<8x12xf32>, vector<12x48xf32>, vector<8x48xf32> -> vector<8x48xf32>
    %138 = arith.addf %136, %137 : vector<8x48xf32>
    %139 = vector.extract_strided_slice %138 {offsets = [0, 0], sizes = [8, 12], strides = [1, 1]} : vector<8x48xf32> to vector<8x12xf32>
    %140 = arith.negf %139 : vector<8x12xf32>
    %141 = math.exp %140 : vector<8x12xf32>
    %cst_36 = arith.constant 1.000000e+00 : f32
    %142 = vector.broadcast %cst_36 : f32 to vector<8x12xf32>
    %143 = arith.addf %142, %141 : vector<8x12xf32>
    %144 = arith.divf %142, %143 : vector<8x12xf32>
    %145 = vector.extract_strided_slice %138 {offsets = [0, 12], sizes = [8, 12], strides = [1, 1]} : vector<8x48xf32> to vector<8x12xf32>
    %146 = arith.negf %145 : vector<8x12xf32>
    %147 = math.exp %146 : vector<8x12xf32>
    %cst_37 = arith.constant 1.000000e+00 : f32
    %148 = vector.broadcast %cst_37 : f32 to vector<8x12xf32>
    %149 = arith.addf %148, %147 : vector<8x12xf32>
    %150 = arith.divf %148, %149 : vector<8x12xf32>
    %151 = vector.extract_strided_slice %138 {offsets = [0, 24], sizes = [8, 12], strides = [1, 1]} : vector<8x48xf32> to vector<8x12xf32>
    %152 = math.tanh %151 : vector<8x12xf32>
    %153 = vector.extract_strided_slice %138 {offsets = [0, 36], sizes = [8, 12], strides = [1, 1]} : vector<8x48xf32> to vector<8x12xf32>
    %154 = arith.negf %153 : vector<8x12xf32>
    %155 = math.exp %154 : vector<8x12xf32>
    %cst_38 = arith.constant 1.000000e+00 : f32
    %156 = vector.broadcast %cst_38 : f32 to vector<8x12xf32>
    %157 = arith.addf %156, %155 : vector<8x12xf32>
    %158 = arith.divf %156, %157 : vector<8x12xf32>
    %159 = arith.mulf %150, %132 : vector<8x12xf32>
    %160 = arith.mulf %144, %152 : vector<8x12xf32>
    %161 = arith.addf %159, %160 : vector<8x12xf32>
    %162 = math.tanh %161 : vector<8x12xf32>
    %163 = arith.mulf %158, %162 : vector<8x12xf32>
    %164 = vector.extract_strided_slice %73 {offsets = [3, 0, 0], sizes = [1, 8, 48], strides = [1, 1, 1]} : vector<7x8x48xf32> to vector<1x8x48xf32>
    %165 = vector.shape_cast %164 : vector<1x8x48xf32> to vector<8x48xf32>
    %cst_39 = arith.constant dense<0.000000e+00> : vector<8x48xf32>
    %166 = tpu.matmul %163, %74, %cst_39 {dimension_numbers = #tpu.dot_dimension_numbers<[1], [0], [0], [1], [0, 0, 1, 1], [], []>} : vector<8x12xf32>, vector<12x48xf32>, vector<8x48xf32> -> vector<8x48xf32>
    %167 = arith.addf %165, %166 : vector<8x48xf32>
    %168 = vector.extract_strided_slice %167 {offsets = [0, 0], sizes = [8, 12], strides = [1, 1]} : vector<8x48xf32> to vector<8x12xf32>
    %169 = arith.negf %168 : vector<8x12xf32>
    %170 = math.exp %169 : vector<8x12xf32>
    %cst_40 = arith.constant 1.000000e+00 : f32
    %171 = vector.broadcast %cst_40 : f32 to vector<8x12xf32>
    %172 = arith.addf %171, %170 : vector<8x12xf32>
    %173 = arith.divf %171, %172 : vector<8x12xf32>
    %174 = vector.extract_strided_slice %167 {offsets = [0, 12], sizes = [8, 12], strides = [1, 1]} : vector<8x48xf32> to vector<8x12xf32>
    %175 = arith.negf %174 : vector<8x12xf32>
    %176 = math.exp %175 : vector<8x12xf32>
    %cst_41 = arith.constant 1.000000e+00 : f32
    %177 = vector.broadcast %cst_41 : f32 to vector<8x12xf32>
    %178 = arith.addf %177, %176 : vector<8x12xf32>
    %179 = arith.divf %177, %178 : vector<8x12xf32>
    %180 = vector.extract_strided_slice %167 {offsets = [0, 24], sizes = [8, 12], strides = [1, 1]} : vector<8x48xf32> to vector<8x12xf32>
    %181 = math.tanh %180 : vector<8x12xf32>
    %182 = vector.extract_strided_slice %167 {offsets = [0, 36], sizes = [8, 12], strides = [1, 1]} : vector<8x48xf32> to vector<8x12xf32>
    %183 = arith.negf %182 : vector<8x12xf32>
    %184 = math.exp %183 : vector<8x12xf32>
    %cst_42 = arith.constant 1.000000e+00 : f32
    %185 = vector.broadcast %cst_42 : f32 to vector<8x12xf32>
    %186 = arith.addf %185, %184 : vector<8x12xf32>
    %187 = arith.divf %185, %186 : vector<8x12xf32>
    %188 = arith.mulf %179, %161 : vector<8x12xf32>
    %189 = arith.mulf %173, %181 : vector<8x12xf32>
    %190 = arith.addf %188, %189 : vector<8x12xf32>
    %191 = math.tanh %190 : vector<8x12xf32>
    %192 = arith.mulf %187, %191 : vector<8x12xf32>
    %193 = vector.extract_strided_slice %73 {offsets = [4, 0, 0], sizes = [1, 8, 48], strides = [1, 1, 1]} : vector<7x8x48xf32> to vector<1x8x48xf32>
    %194 = vector.shape_cast %193 : vector<1x8x48xf32> to vector<8x48xf32>
    %cst_43 = arith.constant dense<0.000000e+00> : vector<8x48xf32>
    %195 = tpu.matmul %192, %74, %cst_43 {dimension_numbers = #tpu.dot_dimension_numbers<[1], [0], [0], [1], [0, 0, 1, 1], [], []>} : vector<8x12xf32>, vector<12x48xf32>, vector<8x48xf32> -> vector<8x48xf32>
    %196 = arith.addf %194, %195 : vector<8x48xf32>
    %197 = vector.extract_strided_slice %196 {offsets = [0, 0], sizes = [8, 12], strides = [1, 1]} : vector<8x48xf32> to vector<8x12xf32>
    %198 = arith.negf %197 : vector<8x12xf32>
    %199 = math.exp %198 : vector<8x12xf32>
    %cst_44 = arith.constant 1.000000e+00 : f32
    %200 = vector.broadcast %cst_44 : f32 to vector<8x12xf32>
    %201 = arith.addf %200, %199 : vector<8x12xf32>
    %202 = arith.divf %200, %201 : vector<8x12xf32>
    %203 = vector.extract_strided_slice %196 {offsets = [0, 12], sizes = [8, 12], strides = [1, 1]} : vector<8x48xf32> to vector<8x12xf32>
    %204 = arith.negf %203 : vector<8x12xf32>
    %205 = math.exp %204 : vector<8x12xf32>
    %cst_45 = arith.constant 1.000000e+00 : f32
    %206 = vector.broadcast %cst_45 : f32 to vector<8x12xf32>
    %207 = arith.addf %206, %205 : vector<8x12xf32>
    %208 = arith.divf %206, %207 : vector<8x12xf32>
    %209 = vector.extract_strided_slice %196 {offsets = [0, 24], sizes = [8, 12], strides = [1, 1]} : vector<8x48xf32> to vector<8x12xf32>
    %210 = math.tanh %209 : vector<8x12xf32>
    %211 = vector.extract_strided_slice %196 {offsets = [0, 36], sizes = [8, 12], strides = [1, 1]} : vector<8x48xf32> to vector<8x12xf32>
    %212 = arith.negf %211 : vector<8x12xf32>
    %213 = math.exp %212 : vector<8x12xf32>
    %cst_46 = arith.constant 1.000000e+00 : f32
    %214 = vector.broadcast %cst_46 : f32 to vector<8x12xf32>
    %215 = arith.addf %214, %213 : vector<8x12xf32>
    %216 = arith.divf %214, %215 : vector<8x12xf32>
    %217 = arith.mulf %208, %190 : vector<8x12xf32>
    %218 = arith.mulf %202, %210 : vector<8x12xf32>
    %219 = arith.addf %217, %218 : vector<8x12xf32>
    %220 = math.tanh %219 : vector<8x12xf32>
    %221 = arith.mulf %216, %220 : vector<8x12xf32>
    %222 = vector.extract_strided_slice %73 {offsets = [5, 0, 0], sizes = [1, 8, 48], strides = [1, 1, 1]} : vector<7x8x48xf32> to vector<1x8x48xf32>
    %223 = vector.shape_cast %222 : vector<1x8x48xf32> to vector<8x48xf32>
    %cst_47 = arith.constant dense<0.000000e+00> : vector<8x48xf32>
    %224 = tpu.matmul %221, %74, %cst_47 {dimension_numbers = #tpu.dot_dimension_numbers<[1], [0], [0], [1], [0, 0, 1, 1], [], []>} : vector<8x12xf32>, vector<12x48xf32>, vector<8x48xf32> -> vector<8x48xf32>
    %225 = arith.addf %223, %224 : vector<8x48xf32>
    %226 = vector.extract_strided_slice %225 {offsets = [0, 0], sizes = [8, 12], strides = [1, 1]} : vector<8x48xf32> to vector<8x12xf32>
    %227 = arith.negf %226 : vector<8x12xf32>
    %228 = math.exp %227 : vector<8x12xf32>
    %cst_48 = arith.constant 1.000000e+00 : f32
    %229 = vector.broadcast %cst_48 : f32 to vector<8x12xf32>
    %230 = arith.addf %229, %228 : vector<8x12xf32>
    %231 = arith.divf %229, %230 : vector<8x12xf32>
    %232 = vector.extract_strided_slice %225 {offsets = [0, 12], sizes = [8, 12], strides = [1, 1]} : vector<8x48xf32> to vector<8x12xf32>
    %233 = arith.negf %232 : vector<8x12xf32>
    %234 = math.exp %233 : vector<8x12xf32>
    %cst_49 = arith.constant 1.000000e+00 : f32
    %235 = vector.broadcast %cst_49 : f32 to vector<8x12xf32>
    %236 = arith.addf %235, %234 : vector<8x12xf32>
    %237 = arith.divf %235, %236 : vector<8x12xf32>
    %238 = vector.extract_strided_slice %225 {offsets = [0, 24], sizes = [8, 12], strides = [1, 1]} : vector<8x48xf32> to vector<8x12xf32>
    %239 = math.tanh %238 : vector<8x12xf32>
    %240 = vector.extract_strided_slice %225 {offsets = [0, 36], sizes = [8, 12], strides = [1, 1]} : vector<8x48xf32> to vector<8x12xf32>
    %241 = arith.negf %240 : vector<8x12xf32>
    %242 = math.exp %241 : vector<8x12xf32>
    %cst_50 = arith.constant 1.000000e+00 : f32
    %243 = vector.broadcast %cst_50 : f32 to vector<8x12xf32>
    %244 = arith.addf %243, %242 : vector<8x12xf32>
    %245 = arith.divf %243, %244 : vector<8x12xf32>
    %246 = arith.mulf %237, %219 : vector<8x12xf32>
    %247 = arith.mulf %231, %239 : vector<8x12xf32>
    %248 = arith.addf %246, %247 : vector<8x12xf32>
    %249 = math.tanh %248 : vector<8x12xf32>
    %250 = arith.mulf %245, %249 : vector<8x12xf32>
    %251 = vector.extract_strided_slice %73 {offsets = [6, 0, 0], sizes = [1, 8, 48], strides = [1, 1, 1]} : vector<7x8x48xf32> to vector<1x8x48xf32>
    %252 = vector.shape_cast %251 : vector<1x8x48xf32> to vector<8x48xf32>
    %cst_51 = arith.constant dense<0.000000e+00> : vector<8x48xf32>
    %253 = tpu.matmul %250, %74, %cst_51 {dimension_numbers = #tpu.dot_dimension_numbers<[1], [0], [0], [1], [0, 0, 1, 1], [], []>} : vector<8x12xf32>, vector<12x48xf32>, vector<8x48xf32> -> vector<8x48xf32>
    %254 = arith.addf %252, %253 : vector<8x48xf32>
    %255 = vector.extract_strided_slice %254 {offsets = [0, 0], sizes = [8, 12], strides = [1, 1]} : vector<8x48xf32> to vector<8x12xf32>
    %256 = arith.negf %255 : vector<8x12xf32>
    %257 = math.exp %256 : vector<8x12xf32>
    %cst_52 = arith.constant 1.000000e+00 : f32
    %258 = vector.broadcast %cst_52 : f32 to vector<8x12xf32>
    %259 = arith.addf %258, %257 : vector<8x12xf32>
    %260 = arith.divf %258, %259 : vector<8x12xf32>
    %261 = vector.extract_strided_slice %254 {offsets = [0, 12], sizes = [8, 12], strides = [1, 1]} : vector<8x48xf32> to vector<8x12xf32>
    %262 = arith.negf %261 : vector<8x12xf32>
    %263 = math.exp %262 : vector<8x12xf32>
    %cst_53 = arith.constant 1.000000e+00 : f32
    %264 = vector.broadcast %cst_53 : f32 to vector<8x12xf32>
    %265 = arith.addf %264, %263 : vector<8x12xf32>
    %266 = arith.divf %264, %265 : vector<8x12xf32>
    %267 = vector.extract_strided_slice %254 {offsets = [0, 24], sizes = [8, 12], strides = [1, 1]} : vector<8x48xf32> to vector<8x12xf32>
    %268 = math.tanh %267 : vector<8x12xf32>
    %269 = vector.extract_strided_slice %254 {offsets = [0, 36], sizes = [8, 12], strides = [1, 1]} : vector<8x48xf32> to vector<8x12xf32>
    %270 = arith.negf %269 : vector<8x12xf32>
    %271 = math.exp %270 : vector<8x12xf32>
    %cst_54 = arith.constant 1.000000e+00 : f32
    %272 = vector.broadcast %cst_54 : f32 to vector<8x12xf32>
    %273 = arith.addf %272, %271 : vector<8x12xf32>
    %274 = arith.divf %272, %273 : vector<8x12xf32>
    %275 = arith.mulf %266, %248 : vector<8x12xf32>
    %276 = arith.mulf %260, %268 : vector<8x12xf32>
    %277 = arith.addf %275, %276 : vector<8x12xf32>
    %278 = math.tanh %277 : vector<8x12xf32>
    %279 = arith.mulf %274, %278 : vector<8x12xf32>
    %c0_55 = arith.constant 0 : index
    %c0_56 = arith.constant 0 : index
    %280 = vector.load %arg6[%c0_55, %c0_56] : memref<8x12xf32, #tpu.memory_space<vmem>>, vector<8x12xf32>
    tpu.vector_store %arg6[%c0_55, %c0_56], %279 {strides = array<i32>} : memref<8x12xf32, #tpu.memory_space<vmem>>, vector<8x12xf32>,
    return
  }
}

</mosaic_0001>

<llo_original>
// kernel: tpu_custom_call.1
$region0: #{tpu_custom_call.1}
  #allocation0 [shape = 'u32[]', space=smem, size = 0x4, offset = 0x4, fixed_abs, tag = 'smem constant byte address 0x4 - core index']
  #allocation1 [shape = 'u32[144,128]{1,0:T(1,128)}', space=vmem, size = 0x12000, scoped, tag = 'internal scratch']
  %s0 = inlined_call_operand.vmem [shape: f32[16,8,4], index: 0, kind: input, shape index: {}]
  %s1 = inlined_call_operand.vmem [shape: f32[10,4,12], index: 1, kind: input, shape index: {}]
  %s2 = inlined_call_operand.vmem [shape: f32[1,12], index: 2, kind: input, shape index: {}]
  %s3 = inlined_call_operand.vmem [shape: f32[12,48], index: 3, kind: input, shape index: {}]
  %s4 = inlined_call_operand.vmem [shape: f32[12,48], index: 4, kind: input, shape index: {}]
  %s5 = inlined_call_operand.vmem [shape: f32[1,48], index: 5, kind: input, shape index: {}]
  %s6 = inlined_call_operand.hbm [shape: f32[8,12], index: 6, kind: output, shape index: {}]
  %s7 = sld [smem:[#allocation0]]
  $region34: #{tpu_custom_call.1} parent=0
    _
  %s9 = ssub.s32 1, %s7
  %s10 = scalar_select 0, %s9, %s7
  $region1: #{tpu_custom_call.1} parent=0
    #allocation2 [shape = 'u8[4096]{0}', space=vmem, size = 0x1000, scoped, tag = 'output window, operand 0, single buffered']
    #allocation3 [shape = 's32[1]{0}', space=sflag, size = 0x4, scoped, tag = 'scoped memory for tpu_custom_call.1']
    %11 = vsyncpa [#allocation3], 0
    // Predicated region
    $region2: #{tpu_custom_call.1} parent=1 // pred_check
      _
    $region3: #{tpu_custom_call.1} parent=1 // pred_check_branch
      %13 = sbr.rel (0) target = $region5
    $region4: #{tpu_custom_call.1} parent=1 // pred_region
      _
    $region5: #{tpu_custom_call.1} parent=1 // pred_fallthru
      _
    // Predicated region
    $region6: #{tpu_custom_call.1} parent=1 // pred_check
      _
    $region7: #{tpu_custom_call.1} parent=1 // pred_check_branch
      %15 = sbr.rel (0) target = $region9
    $region8: #{tpu_custom_call.1} parent=1 // pred_region
      _
    $region9: #{tpu_custom_call.1} parent=1 // pred_fallthru
      _
    // Predicated region
    $region10: #{tpu_custom_call.1} parent=1 // pred_check
      _
    $region11: #{tpu_custom_call.1} parent=1 // pred_check_branch
      %17 = sbr.rel (0) target = $region13
    $region12: #{tpu_custom_call.1} parent=1 // pred_region
      _
    $region13: #{tpu_custom_call.1} parent=1 // pred_fallthru
      _
    // Predicated region
    $region14: #{tpu_custom_call.1} parent=1 // pred_check
      _
    $region15: #{tpu_custom_call.1} parent=1 // pred_check_branch
      %19 = sbr.rel (0) target = $region17
    $region16: #{tpu_custom_call.1} parent=1 // pred_region
      _
    $region17: #{tpu_custom_call.1} parent=1 // pred_fallthru
      _
    // Predicated region
    $region18: #{tpu_custom_call.1} parent=1 // pred_check
      _
    $region19: #{tpu_custom_call.1} parent=1 // pred_check_branch
      %21 = sbr.rel (0) target = $region21
    $region20: #{tpu_custom_call.1} parent=1 // pred_region
      _
    $region21: #{tpu_custom_call.1} parent=1 // pred_fallthru
      _
    // Predicated region
    $region22: #{tpu_custom_call.1} parent=1 // pred_check
      _
    $region23: #{tpu_custom_call.1} parent=1 // pred_check_branch
      %23 = sbr.rel (0) target = $region25
    $region24: #{tpu_custom_call.1} parent=1 // pred_region
      _
    $region25: #{tpu_custom_call.1} parent=1 // pred_fallthru
      _
    %v24 = vld [vmem:[%s0] sm:$0xff]
    %v25 = vld [vmem:[%s0 + $0x8] sm:$0xff]
    %v26 = vld [vmem:[%s0 + $0x10] sm:$0xff]
    %v27 = vld [vmem:[%s0 + $0x18] sm:$0xff]
    %v28 = vld [vmem:[%s0 + $0x20] sm:$0xff]
    %v29 = vld [vmem:[%s0 + $0x28] sm:$0xff]
    %v30 = vld [vmem:[%s0 + $0x30] sm:$0xff]
    %v31 = vld [vmem:[%s0 + $0x38] sm:$0xff]
    %v32 = vld [vmem:[%s0 + $0x40] sm:$0xff]
    %v33 = vld [vmem:[%s0 + $0x48] sm:$0xff]
    %v34 = vld [vmem:[%s0 + $0x50] sm:$0xff]
    %v35 = vld [vmem:[%s0 + $0x58] sm:$0xff]
    %v36 = vld [vmem:[%s0 + $0x60] sm:$0xff]
    %v37 = vld [vmem:[%s0 + $0x68] sm:$0xff]
    %v38 = vld [vmem:[%s0 + $0x70] sm:$0xff]
    %v39 = vld [vmem:[%s0 + $0x78] sm:$0xff]
    %v40 = vld [vmem:[%s1] sm:$0xf]
    %v41 = vld [vmem:[%s1 + $0x4] sm:$0xf]
    %v42 = vld [vmem:[%s1 + $0x8] sm:$0xf]
    %v43 = vld [vmem:[%s1 + $0xc] sm:$0xf]
    %v44 = vld [vmem:[%s1 + $0x10] sm:$0xf]
    %v45 = vld [vmem:[%s1 + $0x14] sm:$0xf]
    %v46 = vld [vmem:[%s1 + $0x18] sm:$0xf]
    %v47 = vld [vmem:[%s1 + $0x1c] sm:$0xf]
    %v48 = vld [vmem:[%s1 + $0x20] sm:$0xf]
    %v49 = vld [vmem:[%s1 + $0x24] sm:$0xf]
    %vm50 = vcmask 31744
    %v52 = vsel %vm50, %v25, 0
    %v55 = vsel %vm50, %v26, 0
    %v58 = vsel %vm50, %v27, 0
    %v61 = vsel %vm50, %v28, 0
    %v64 = vsel %vm50, %v29, 0
    %v67 = vsel %vm50, %v30, 0
    %v70 = vsel %vm50, %v31, 0
    %vm72 = vcmask 1043456
    %v74 = vsel %vm72, %v41, 0
    %76 = vmatprep.subr.mxu0 0.0
    %77 = vmatpush1.msra.mxu0 %v74
    %78 = vmatprep.subr.mxu0 0.0
    %79 = vmatpush1.msra.mxu0 0.0
    %80 = vmatprep.subr.mxu0 0.0
    %81 = vmatpush1.msra.mxu0 0.0
    %82 = vmatprep.subr.mxu0 0.0
    %83 = vmatpush1.msra.mxu0 0.0
    %84 = vmatprep.subr.mxu0 0.0
    %85 = vmatpush1.msra.mxu0 0.0
    %86 = vmatprep.subr.mxu0 0.0
    %87 = vmatpush1.msra.mxu0 0.0
    %88 = vmatprep.subr.mxu0 0.0
    %89 = vmatpush1.msra.mxu0 0.0
    %90 = vmatprep.subr.mxu0 0.0
    %91 = vmatpush1.msra.mxu0 0.0
    %92 = vmatprep.subr.mxu0 0.0
    %93 = vmatpush1.msra.mxu0 0.0
    %94 = vmatprep.subr.mxu0 0.0
    %95 = vmatpush1.msra.mxu0 0.0
    %96 = vmatprep.subr.mxu0 0.0
    %97 = vmatpush1.msra.mxu0 0.0
    %98 = vmatprep.subr.mxu0 0.0
    %99 = vmatpush1.msra.mxu0 0.0
    %100 = vmatprep.subr.mxu0 0.0
    %101 = vmatpush1.msra.mxu0 0.0
    %102 = vmatprep.subr.mxu0 0.0
    %103 = vmatpush1.msra.mxu0 0.0
    %104 = vmatprep.subr.mxu0 0.0
    %105 = vmatpush1.msra.mxu0 0.0
    %106 = vmatprep.subr.mxu0 0.0
    %107 = vmatpush1.msra.mxu0 0.0
    %108 = vmatprep.subr.mxu0 0.0
    %109 = vmatpush1.msra.mxu0 0.0
    %110 = vmatprep.subr.mxu0 0.0
    %111 = vmatpush1.msra.mxu0 0.0
    %112 = vmatprep.subr.mxu0 0.0
    %113 = vmatpush1.msra.mxu0 0.0
    %114 = vmatprep.subr.mxu0 0.0
    %115 = vmatpush1.msra.mxu0 0.0
    %116 = vmatprep.subr.mxu0 0.0
    %117 = vmatpush1.msra.mxu0 0.0
    %118 = vmatprep.subr.mxu0 0.0
    %119 = vmatpush1.msra.mxu0 0.0
    %120 = vmatprep.subr.mxu0 0.0
    %121 = vmatpush1.msra.mxu0 0.0
    %122 = vmatprep.subr.mxu0 0.0
    %123 = vmatpush1.msra.mxu0 0.0
    %124 = vmatprep.subr.mxu0 0.0
    %125 = vmatpush1.msra.mxu0 0.0
    %126 = vmatprep.subr.mxu0 0.0
    %127 = vmatpush1.msra.mxu0 0.0
    %128 = vmatprep.subr.mxu0 0.0
    %129 = vmatpush1.msra.mxu0 0.0
    %130 = vmatprep.subr.mxu0 0.0
    %131 = vmatpush1.msra.mxu0 0.0
    %132 = vmatprep.subr.mxu0 0.0
    %133 = vmatpush1.msra.mxu0 0.0
    %134 = vmatprep.subr.mxu0 0.0
    %135 = vmatpush1.msra.mxu0 0.0
    %136 = vmatprep.subr.mxu0 0.0
    %137 = vmatpush1.msra.mxu0 0.0
    %138 = vmatprep.subr.mxu0 0.0
    %139 = vmatpush1.msra.mxu0 0.0
    %140 = vmatprep.mubr.f32.mxu0 0.0
    %141 = vmatmul.mubr.f32.gmra.mrb[0].mxu0 %v52
    %v142 = vpop.f32.mrb[0].mxu0
    %v143 = vadd.f32 0.0, %v142
    %v144 = vpop.f32.mrb[0].mxu0
    %145 = vmatprep.mubr.f32.mxu0 0.0
    %146 = vmatmul.mubr.f32.gmra.mrb[0].mxu0 %v55
    %v147 = vpop.f32.mrb[0].mxu0
    %v148 = vadd.f32 0.0, %v147
    %v149 = vpop.f32.mrb[0].mxu0
    %150 = vmatprep.mubr.f32.mxu0 0.0
    %151 = vmatmul.mubr.f32.gmra.mrb[0].mxu0 %v58
    %v152 = vpop.f32.mrb[0].mxu0
    %v153 = vadd.f32 0.0, %v152
    %v154 = vpop.f32.mrb[0].mxu0
    %155 = vmatprep.mubr.f32.mxu0 0.0
    %156 = vmatmul.mubr.f32.gmra.mrb[0].mxu0 %v61
    %v157 = vpop.f32.mrb[0].mxu0
    %v158 = vadd.f32 0.0, %v157
    %v159 = vpop.f32.mrb[0].mxu0
    %160 = vmatprep.mubr.f32.mxu0 0.0
    %161 = vmatmul.mubr.f32.gmra.mrb[0].mxu0 %v64
    %v162 = vpop.f32.mrb[0].mxu0
    %v163 = vadd.f32 0.0, %v162
    %v164 = vpop.f32.mrb[0].mxu0
    %165 = vmatprep.mubr.f32.mxu0 0.0
    %166 = vmatmul.mubr.f32.gmra.mrb[0].mxu0 %v67
    %v167 = vpop.f32.mrb[0].mxu0
    %v168 = vadd.f32 0.0, %v167
    %v169 = vpop.f32.mrb[0].mxu0
    %170 = vmatprep.mubr.f32.mxu0 0.0
    %171 = vmatmul.mubr.f32.gmra.mrb[0].mxu0 %v70
    %v172 = vpop.f32.mrb[0].mxu0
    %v173 = vadd.f32 0.0, %v172
    %v174 = vpop.f32.mrb[0].mxu0
    %175 = vdwg.mxu0
    %v177 = vsel %vm50, %v24, 0
    %v180 = vsel %vm72, %v40, 0
    %182 = vmatprep.subr.mxu0 0.0
    %183 = vmatpush1.msra.mxu0 %v180
    %184 = vmatprep.subr.mxu0 0.0
    %185 = vmatpush1.msra.mxu0 0.0
    %186 = vmatprep.subr.mxu0 0.0
    %187 = vmatpush1.msra.mxu0 0.0
    %188 = vmatprep.subr.mxu0 0.0
    %189 = vmatpush1.msra.mxu0 0.0
    %190 = vmatprep.subr.mxu0 0.0
    %191 = vmatpush1.msra.mxu0 0.0
    %192 = vmatprep.subr.mxu0 0.0
    %193 = vmatpush1.msra.mxu0 0.0
    %194 = vmatprep.subr.mxu0 0.0
    %195 = vmatpush1.msra.mxu0 0.0
    %196 = vmatprep.subr.mxu0 0.0
    %197 = vmatpush1.msra.mxu0 0.0
    %198 = vmatprep.subr.mxu0 0.0
    %199 = vmatpush1.msra.mxu0 0.0
    %200 = vmatprep.subr.mxu0 0.0
    %201 = vmatpush1.msra.mxu0 0.0
    %202 = vmatprep.subr.mxu0 0.0
    %203 = vmatpush1.msra.mxu0 0.0
    %204 = vmatprep.subr.mxu0 0.0
    %205 = vmatpush1.msra.mxu0 0.0
    %206 = vmatprep.subr.mxu0 0.0
    %207 = vmatpush1.msra.mxu0 0.0
    %208 = vmatprep.subr.mxu0 0.0
    %209 = vmatpush1.msra.mxu0 0.0
    %210 = vmatprep.subr.mxu0 0.0
    %211 = vmatpush1.msra.mxu0 0.0
    %212 = vmatprep.subr.mxu0 0.0
    %213 = vmatpush1.msra.mxu0 0.0
    %214 = vmatprep.subr.mxu0 0.0
    %215 = vmatpush1.msra.mxu0 0.0
    %216 = vmatprep.subr.mxu0 0.0
    %217 = vmatpush1.msra.mxu0 0.0
    %218 = vmatprep.subr.mxu0 0.0
    %219 = vmatpush1.msra.mxu0 0.0
    %220 = vmatprep.subr.mxu0 0.0
    %221 = vmatpush1.msra.mxu0 0.0
    %222 = vmatprep.subr.mxu0 0.0
    %223 = vmatpush1.msra.mxu0 0.0
    %224 = vmatprep.subr.mxu0 0.0
    %225 = vmatpush1.msra.mxu0 0.0
    %226 = vmatprep.subr.mxu0 0.0
    %227 = vmatpush1.msra.mxu0 0.0
    %228 = vmatprep.subr.mxu0 0.0
    %229 = vmatpush1.msra.mxu0 0.0
    %230 = vmatprep.subr.mxu0 0.0
    %231 = vmatpush1.msra.mxu0 0.0
    %232 = vmatprep.subr.mxu0 0.0
    %233 = vmatpush1.msra.mxu0 0.0
    %234 = vmatprep.subr.mxu0 0.0
    %235 = vmatpush1.msra.mxu0 0.0
    %236 = vmatprep.subr.mxu0 0.0
    %237 = vmatpush1.msra.mxu0 0.0
    %238 = vmatprep.subr.mxu0 0.0
    %239 = vmatpush1.msra.mxu0 0.0
    %240 = vmatprep.subr.mxu0 0.0
    %241 = vmatpush1.msra.mxu0 0.0
    %242 = vmatprep.subr.mxu0 0.0
    %243 = vmatpush1.msra.mxu0 0.0
    %244 = vmatprep.subr.mxu0 0.0
    %245 = vmatpush1.msra.mxu0 0.0
    %246 = vmatprep.mubr.f32.mxu0 0.0
    %247 = vmatmul.mubr.f32.gmra.mrb[0].mxu0 %v177
    %v248 = vpop.f32.mrb[0].mxu0
    %v249 = vadd.f32 %v143, %v248
    %v250 = vpop.f32.mrb[0].mxu0
    %251 = vmatprep.mubr.f32.mxu0 0.0
    %252 = vmatmul.mubr.f32.gmra.mrb[0].mxu0 %v52
    %v253 = vpop.f32.mrb[0].mxu0
    %v254 = vadd.f32 %v148, %v253
    %v255 = vpop.f32.mrb[0].mxu0
    %256 = vmatprep.mubr.f32.mxu0 0.0
    %257 = vmatmul.mubr.f32.gmra.mrb[0].mxu0 %v55
    %v258 = vpop.f32.mrb[0].mxu0
    %v259 = vadd.f32 %v153, %v258
    %v260 = vpop.f32.mrb[0].mxu0
    %261 = vmatprep.mubr.f32.mxu0 0.0
    %262 = vmatmul.mubr.f32.gmra.mrb[0].mxu0 %v58
    %v263 = vpop.f32.mrb[0].mxu0
    %v264 = vadd.f32 %v158, %v263
    %v265 = vpop.f32.mrb[0].mxu0
    %266 = vmatprep.mubr.f32.mxu0 0.0
    %267 = vmatmul.mubr.f32.gmra.mrb[0].mxu0 %v61
    %v268 = vpop.f32.mrb[0].mxu0
    %v269 = vadd.f32 %v163, %v268
    %v270 = vpop.f32.mrb[0].mxu0
    %271 = vmatprep.mubr.f32.mxu0 0.0
    %272 = vmatmul.mubr.f32.gmra.mrb[0].mxu0 %v64
    %v273 = vpop.f32.mrb[0].mxu0
    %v274 = vadd.f32 %v168, %v273
    %v275 = vpop.f32.mrb[0].mxu0
    %276 = vmatprep.mubr.f32.mxu0 0.0
    %277 = vmatmul.mubr.f32.gmra.mrb[0].mxu0 %v67
    %v278 = vpop.f32.mrb[0].mxu0
    %v279 = vadd.f32 %v173, %v278
    %v280 = vpop.f32.mrb[0].mxu0
    %281 = vdwg.mxu0
    %v283 = vsel %vm50, %v32, 0
    %v286 = vsel %vm72, %v42, 0
    %288 = vmatprep.subr.mxu0 0.0
    %289 = vmatpush1.msra.mxu0 %v286
    %290 = vmatprep.subr.mxu0 0.0
    %291 = vmatpush1.msra.mxu0 0.0
    %292 = vmatprep.subr.mxu0 0.0
    %293 = vmatpush1.msra.mxu0 0.0
    %294 = vmatprep.subr.mxu0 0.0
    %295 = vmatpush1.msra.mxu0 0.0
    %296 = vmatprep.subr.mxu0 0.0
    %297 = vmatpush1.msra.mxu0 0.0
    %298 = vmatprep.subr.mxu0 0.0
    %299 = vmatpush1.msra.mxu0 0.0
    %300 = vmatprep.subr.mxu0 0.0
    %301 = vmatpush1.msra.mxu0 0.0
    %302 = vmatprep.subr.mxu0 0.0
    %303 = vmatpush1.msra.mxu0 0.0
    %304 = vmatprep.subr.mxu0 0.0
    %305 = vmatpush1.msra.mxu0 0.0
    %306 = vmatprep.subr.mxu0 0.0
    %307 = vmatpush1.msra.mxu0 0.0
    %308 = vmatprep.subr.mxu0 0.0
    %309 = vmatpush1.msra.mxu0 0.0
    %310 = vmatprep.subr.mxu0 0.0
    %311 = vmatpush1.msra.mxu0 0.0
    %312 = vmatprep.subr.mxu0 0.0
    %313 = vmatpush1.msra.mxu0 0.0
    %314 = vmatprep.subr.mxu0 0.0
    %315 = vmatpush1.msra.mxu0 0.0
    %316 = vmatprep.subr.mxu0 0.0
    %317 = vmatpush1.msra.mxu0 0.0
    %318 = vmatprep.subr.mxu0 0.0
    %319 = vmatpush1.msra.mxu0 0.0
    %320 = vmatprep.subr.mxu0 0.0
    %321 = vmatpush1.msra.mxu0 0.0
    %322 = vmatprep.subr.mxu0 0.0
    %323 = vmatpush1.msra.mxu0 0.0
    %324 = vmatprep.subr.mxu0 0.0
    %325 = vmatpush1.msra.mxu0 0.0
    %326 = vmatprep.subr.mxu0 0.0
    %327 = vmatpush1.msra.mxu0 0.0
    %328 = vmatprep.subr.mxu0 0.0
    %329 = vmatpush1.msra.mxu0 0.0
    %330 = vmatprep.subr.mxu0 0.0
    %331 = vmatpush1.msra.mxu0 0.0
    %332 = vmatprep.subr.mxu0 0.0
    %333 = vmatpush1.msra.mxu0 0.0
    %334 = vmatprep.subr.mxu0 0.0
    %335 = vmatpush1.msra.mxu0 0.0
    %336 = vmatprep.subr.mxu0 0.0
    %337 = vmatpush1.msra.mxu0 0.0
    %338 = vmatprep.subr.mxu0 0.0
    %339 = vmatpush1.msra.mxu0 0.0
    %340 = vmatprep.subr.mxu0 0.0
    %341 = vmatpush1.msra.mxu0 0.0
    %342 = vmatprep.subr.mxu0 0.0
    %343 = vmatpush1.msra.mxu0 0.0
    %344 = vmatprep.subr.mxu0 0.0
    %345 = vmatpush1.msra.mxu0 0.0
    %346 = vmatprep.subr.mxu0 0.0
    %347 = vmatpush1.msra.mxu0 0.0
    %348 = vmatprep.subr.mxu0 0.0
    %349 = vmatpush1.msra.mxu0 0.0
    %350 = vmatprep.subr.mxu0 0.0
    %351 = vmatpush1.msra.mxu0 0.0
    %352 = vmatprep.mubr.f32.mxu0 0.0
    %353 = vmatmul.mubr.f32.gmra.mrb[0].mxu0 %v55
    %v354 = vpop.f32.mrb[0].mxu0
    %v355 = vadd.f32 0.0, %v354
    %v356 = vpop.f32.mrb[0].mxu0
    %357 = vmatprep.mubr.f32.mxu0 0.0
    %358 = vmatmul.mubr.f32.gmra.mrb[0].mxu0 %v58
    %v359 = vpop.f32.mrb[0].mxu0
    %v360 = vadd.f32 0.0, %v359
    %v361 = vpop.f32.mrb[0].mxu0
    %362 = vmatprep.mubr.f32.mxu0 0.0
    %363 = vmatmul.mubr.f32.gmra.mrb[0].mxu0 %v61
    %v364 = vpop.f32.mrb[0].mxu0
    %v365 = vadd.f32 0.0, %v364
    %v366 = vpop.f32.mrb[0].mxu0
    %367 = vmatprep.mubr.f32.mxu0 0.0
    %368 = vmatmul.mubr.f32.gmra.mrb[0].mxu0 %v64
    %v369 = vpop.f32.mrb[0].mxu0
    %v370 = vadd.f32 0.0, %v369
    %v371 = vpop.f32.mrb[0].mxu0
    %372 = vmatprep.mubr.f32.mxu0 0.0
    %373 = vmatmul.mubr.f32.gmra.mrb[0].mxu0 %v67
    %v374 = vpop.f32.mrb[0].mxu0
    %v375 = vadd.f32 0.0, %v374
    %v376 = vpop.f32.mrb[0].mxu0
    %377 = vmatprep.mubr.f32.mxu0 0.0
    %378 = vmatmul.mubr.f32.gmra.mrb[0].mxu0 %v70
    %v379 = vpop.f32.mrb[0].mxu0
    %v380 = vadd.f32 0.0, %v379
    %v381 = vpop.f32.mrb[0].mxu0
    %382 = vmatprep.mubr.f32.mxu0 0.0
    %383 = vmatmul.mubr.f32.gmra.mrb[0].mxu0 %v283
    %v384 = vpop.f32.mrb[0].mxu0
    %v385 = vadd.f32 0.0, %v384
    %v386 = vpop.f32.mrb[0].mxu0
    %387 = vdwg.mxu0
    %v388 = vadd.f32 %v249, %v355
    %v389 = vadd.f32 %v254, %v360
    %v390 = vadd.f32 %v259, %v365
    %v391 = vadd.f32 %v264, %v370
    %v392 = vadd.f32 %v269, %v375
    %v393 = vadd.f32 %v274, %v380
    %v394 = vadd.f32 %v279, %v385
    %v396 = vsel %vm50, %v33, 0
    %v399 = vsel %vm72, %v43, 0
    %401 = vmatprep.subr.mxu0 0.0
    %402 = vmatpush1.msra.mxu0 %v399
    %403 = vmatprep.subr.mxu0 0.0
    %404 = vmatpush1.msra.mxu0 0.0
    %405 = vmatprep.subr.mxu0 0.0
    %406 = vmatpush1.msra.mxu0 0.0
    %407 = vmatprep.subr.mxu0 0.0
    %408 = vmatpush1.msra.mxu0 0.0
    %409 = vmatprep.subr.mxu0 0.0
    %410 = vmatpush1.msra.mxu0 0.0
    %411 = vmatprep.subr.mxu0 0.0
    %412 = vmatpush1.msra.mxu0 0.0
    %413 = vmatprep.subr.mxu0 0.0
    %414 = vmatpush1.msra.mxu0 0.0
    %415 = vmatprep.subr.mxu0 0.0
    %416 = vmatpush1.msra.mxu0 0.0
    %417 = vmatprep.subr.mxu0 0.0
    %418 = vmatpush1.msra.mxu0 0.0
    %419 = vmatprep.subr.mxu0 0.0
    %420 = vmatpush1.msra.mxu0 0.0
    %421 = vmatprep.subr.mxu0 0.0
    %422 = vmatpush1.msra.mxu0 0.0
    %423 = vmatprep.subr.mxu0 0.0
    %424 = vmatpush1.msra.mxu0 0.0
    %425 = vmatprep.subr.mxu0 0.0
    %426 = vmatpush1.msra.mxu0 0.0
    %427 = vmatprep.subr.mxu0 0.0
    %428 = vmatpush1.msra.mxu0 0.0
    %429 = vmatprep.subr.mxu0 0.0
    %430 = vmatpush1.msra.mxu0 0.0
    %431 = vmatprep.subr.mxu0 0.0
    %432 = vmatpush1.msra.mxu0 0.0
    %433 = vmatprep.subr.mxu0 0.0
    %434 = vmatpush1.msra.mxu0 0.0
    %435 = vmatprep.subr.mxu0 0.0
    %436 = vmatpush1.msra.mxu0 0.0
    %437 = vmatprep.subr.mxu0 0.0
    %438 = vmatpush1.msra.mxu0 0.0
    %439 = vmatprep.subr.mxu0 0.0
    %440 = vmatpush1.msra.mxu0 0.0
    %441 = vmatprep.subr.mxu0 0.0
    %442 = vmatpush1.msra.mxu0 0.0
    %443 = vmatprep.subr.mxu0 0.0
    %444 = vmatpush1.msra.mxu0 0.0
    %445 = vmatprep.subr.mxu0 0.0
    %446 = vmatpush1.msra.mxu0 0.0
    %447 = vmatprep.subr.mxu0 0.0
    %448 = vmatpush1.msra.mxu0 0.0
    %449 = vmatprep.subr.mxu0 0.0
    %450 = vmatpush1.msra.mxu0 0.0
    %451 = vmatprep.subr.mxu0 0.0
    %452 = vmatpush1.msra.mxu0 0.0
    %453 = vmatprep.subr.mxu0 0.0
    %454 = vmatpush1.msra.mxu0 0.0
    %455 = vmatprep.subr.mxu0 0.0
    %456 = vmatpush1.msra.mxu0 0.0
    %457 = vmatprep.subr.mxu0 0.0
    %458 = vmatpush1.msra.mxu0 0.0
    %459 = vmatprep.subr.mxu0 0.0
    %460 = vmatpush1.msra.mxu0 0.0
    %461 = vmatprep.subr.mxu0 0.0
    %462 = vmatpush1.msra.mxu0 0.0
    %463 = vmatprep.subr.mxu0 0.0
    %464 = vmatpush1.msra.mxu0 0.0
    %465 = vmatprep.mubr.f32.mxu0 0.0
    %466 = vmatmul.mubr.f32.gmra.mrb[0].mxu0 %v58
    %v467 = vpop.f32.mrb[0].mxu0
    %v468 = vadd.f32 0.0, %v467
    %v469 = vpop.f32.mrb[0].mxu0
    %470 = vmatprep.mubr.f32.mxu0 0.0
    %471 = vmatmul.mubr.f32.gmra.mrb[0].mxu0 %v61
    %v472 = vpop.f32.mrb[0].mxu0
    %v473 = vadd.f32 0.0, %v472
    %v474 = vpop.f32.mrb[0].mxu0
    %475 = vmatprep.mubr.f32.mxu0 0.0
    %476 = vmatmul.mubr.f32.gmra.mrb[0].mxu0 %v64
    %v477 = vpop.f32.mrb[0].mxu0
    %v478 = vadd.f32 0.0, %v477
    %v479 = vpop.f32.mrb[0].mxu0
    %480 = vmatprep.mubr.f32.mxu0 0.0
    %481 = vmatmul.mubr.f32.gmra.mrb[0].mxu0 %v67
    %v482 = vpop.f32.mrb[0].mxu0
    %v483 = vadd.f32 0.0, %v482
    %v484 = vpop.f32.mrb[0].mxu0
    %485 = vmatprep.mubr.f32.mxu0 0.0
    %486 = vmatmul.mubr.f32.gmra.mrb[0].mxu0 %v70
    %v487 = vpop.f32.mrb[0].mxu0
    %v488 = vadd.f32 0.0, %v487
    %v489 = vpop.f32.mrb[0].mxu0
    %490 = vmatprep.mubr.f32.mxu0 0.0
    %491 = vmatmul.mubr.f32.gmra.mrb[0].mxu0 %v283
    %v492 = vpop.f32.mrb[0].mxu0
    %v493 = vadd.f32 0.0, %v492
    %v494 = vpop.f32.mrb[0].mxu0
    %495 = vmatprep.mubr.f32.mxu0 0.0
    %496 = vmatmul.mubr.f32.gmra.mrb[0].mxu0 %v396
    %v497 = vpop.f32.mrb[0].mxu0
    %v498 = vadd.f32 0.0, %v497
    %v499 = vpop.f32.mrb[0].mxu0
    %500 = vdwg.mxu0
    %v501 = vadd.f32 %v388, %v468
    %v502 = vadd.f32 %v389, %v473
    %v503 = vadd.f32 %v390, %v478
    %v504 = vadd.f32 %v391, %v483
    %v505 = vadd.f32 %v392, %v488
    %v506 = vadd.f32 %v393, %v493
    %v507 = vadd.f32 %v394, %v498
    %v509 = vsel %vm50, %v34, 0
    %v512 = vsel %vm72, %v44, 0
    %514 = vmatprep.subr.mxu0 0.0
    %515 = vmatpush1.msra.mxu0 %v512
    %516 = vmatprep.subr.mxu0 0.0
    %517 = vmatpush1.msra.mxu0 0.0
    %518 = vmatprep.subr.mxu0 0.0
    %519 = vmatpush1.msra.mxu0 0.0
    %520 = vmatprep.subr.mxu0 0.0
    %521 = vmatpush1.msra.mxu0 0.0
    %522 = vmatprep.subr.mxu0 0.0
    %523 = vmatpush1.msra.mxu0 0.0
    %524 = vmatprep.subr.mxu0 0.0
    %525 = vmatpush1.msra.mxu0 0.0
    %526 = vmatprep.subr.mxu0 0.0
    %527 = vmatpush1.msra.mxu0 0.0
    %528 = vmatprep.subr.mxu0 0.0
    %529 = vmatpush1.msra.mxu0 0.0
    %530 = vmatprep.subr.mxu0 0.0
    %531 = vmatpush1.msra.mxu0 0.0
    %532 = vmatprep.subr.mxu0 0.0
    %533 = vmatpush1.msra.mxu0 0.0
    %534 = vmatprep.subr.mxu0 0.0
    %535 = vmatpush1.msra.mxu0 0.0
    %536 = vmatprep.subr.mxu0 0.0
    %537 = vmatpush1.msra.mxu0 0.0
    %538 = vmatprep.subr.mxu0 0.0
    %539 = vmatpush1.msra.mxu0 0.0
    %540 = vmatprep.subr.mxu0 0.0
    %541 = vmatpush1.msra.mxu0 0.0
    %542 = vmatprep.subr.mxu0 0.0
    %543 = vmatpush1.msra.mxu0 0.0
    %544 = vmatprep.subr.mxu0 0.0
    %545 = vmatpush1.msra.mxu0 0.0
    %546 = vmatprep.subr.mxu0 0.0
    %547 = vmatpush1.msra.mxu0 0.0
    %548 = vmatprep.subr.mxu0 0.0
    %549 = vmatpush1.msra.mxu0 0.0
    %550 = vmatprep.subr.mxu0 0.0
    %551 = vmatpush1.msra.mxu0 0.0
    %552 = vmatprep.subr.mxu0 0.0
    %553 = vmatpush1.msra.mxu0 0.0
    %554 = vmatprep.subr.mxu0 0.0
    %555 = vmatpush1.msra.mxu0 0.0
    %556 = vmatprep.subr.mxu0 0.0
    %557 = vmatpush1.msra.mxu0 0.0
    %558 = vmatprep.subr.mxu0 0.0
    %559 = vmatpush1.msra.mxu0 0.0
    %560 = vmatprep.subr.mxu0 0.0
    %561 = vmatpush1.msra.mxu0 0.0
    %562 = vmatprep.subr.mxu0 0.0
    %563 = vmatpush1.msra.mxu0 0.0
    %564 = vmatprep.subr.mxu0 0.0
    %565 = vmatpush1.msra.mxu0 0.0
    %566 = vmatprep.subr.mxu0 0.0
    %567 = vmatpush1.msra.mxu0 0.0
    %568 = vmatprep.subr.mxu0 0.0
    %569 = vmatpush1.msra.mxu0 0.0
    %570 = vmatprep.subr.mxu0 0.0
    %571 = vmatpush1.msra.mxu0 0.0
    %572 = vmatprep.subr.mxu0 0.0
    %573 = vmatpush1.msra.mxu0 0.0
    %574 = vmatprep.subr.mxu0 0.0
    %575 = vmatpush1.msra.mxu0 0.0
    %576 = vmatprep.subr.mxu0 0.0
    %577 = vmatpush1.msra.mxu0 0.0
    %578 = vmatprep.mubr.f32.mxu0 0.0
    %579 = vmatmul.mubr.f32.gmra.mrb[0].mxu0 %v61
    %v580 = vpop.f32.mrb[0].mxu0
    %v581 = vadd.f32 0.0, %v580
    %v582 = vpop.f32.mrb[0].mxu0
    %583 = vmatprep.mubr.f32.mxu0 0.0
    %584 = vmatmul.mubr.f32.gmra.mrb[0].mxu0 %v64
    %v585 = vpop.f32.mrb[0].mxu0
    %v586 = vadd.f32 0.0, %v585
    %v587 = vpop.f32.mrb[0].mxu0
    %588 = vmatprep.mubr.f32.mxu0 0.0
    %589 = vmatmul.mubr.f32.gmra.mrb[0].mxu0 %v67
    %v590 = vpop.f32.mrb[0].mxu0
    %v591 = vadd.f32 0.0, %v590
    %v592 = vpop.f32.mrb[0].mxu0
    %593 = vmatprep.mubr.f32.mxu0 0.0
    %594 = vmatmul.mubr.f32.gmra.mrb[0].mxu0 %v70
    %v595 = vpop.f32.mrb[0].mxu0
    %v596 = vadd.f32 0.0, %v595
    %v597 = vpop.f32.mrb[0].mxu0
    %598 = vmatprep.mubr.f32.mxu0 0.0
    %599 = vmatmul.mubr.f32.gmra.mrb[0].mxu0 %v283
    %v600 = vpop.f32.mrb[0].mxu0
    %v601 = vadd.f32 0.0, %v600
    %v602 = vpop.f32.mrb[0].mxu0
    %603 = vmatprep.mubr.f32.mxu0 0.0
    %604 = vmatmul.mubr.f32.gmra.mrb[0].mxu0 %v396
    %v605 = vpop.f32.mrb[0].mxu0
    %v606 = vadd.f32 0.0, %v605
    %v607 = vpop.f32.mrb[0].mxu0
    %608 = vmatprep.mubr.f32.mxu0 0.0
    %609 = vmatmul.mubr.f32.gmra.mrb[0].mxu0 %v509
    %v610 = vpop.f32.mrb[0].mxu0
    %v611 = vadd.f32 0.0, %v610
    %v612 = vpop.f32.mrb[0].mxu0
    %613 = vdwg.mxu0
    %v614 = vadd.f32 %v501, %v581
    %v615 = vadd.f32 %v502, %v586
    %v616 = vadd.f32 %v503, %v591
    %v617 = vadd.f32 %v504, %v596
    %v618 = vadd.f32 %v505, %v601
    %v619 = vadd.f32 %v506, %v606
    %v620 = vadd.f32 %v507, %v611
    %v622 = vsel %vm50, %v35, 0
    %v625 = vsel %vm72, %v45, 0
    %627 = vmatprep.subr.mxu0 0.0
    %628 = vmatpush1.msra.mxu0 %v625
    %629 = vmatprep.subr.mxu0 0.0
    %630 = vmatpush1.msra.mxu0 0.0
    %631 = vmatprep.subr.mxu0 0.0
    %632 = vmatpush1.msra.mxu0 0.0
    %633 = vmatprep.subr.mxu0 0.0
    %634 = vmatpush1.msra.mxu0 0.0
    %635 = vmatprep.subr.mxu0 0.0
    %636 = vmatpush1.msra.mxu0 0.0
    %637 = vmatprep.subr.mxu0 0.0
    %638 = vmatpush1.msra.mxu0 0.0
    %639 = vmatprep.subr.mxu0 0.0
    %640 = vmatpush1.msra.mxu0 0.0
    %641 = vmatprep.subr.mxu0 0.0
    %642 = vmatpush1.msra.mxu0 0.0
    %643 = vmatprep.subr.mxu0 0.0
    %644 = vmatpush1.msra.mxu0 0.0
    %645 = vmatprep.subr.mxu0 0.0
    %646 = vmatpush1.msra.mxu0 0.0
    %647 = vmatprep.subr.mxu0 0.0
    %648 = vmatpush1.msra.mxu0 0.0
    %649 = vmatprep.subr.mxu0 0.0
    %650 = vmatpush1.msra.mxu0 0.0
    %651 = vmatprep.subr.mxu0 0.0
    %652 = vmatpush1.msra.mxu0 0.0
    %653 = vmatprep.subr.mxu0 0.0
    %654 = vmatpush1.msra.mxu0 0.0
    %655 = vmatprep.subr.mxu0 0.0
    %656 = vmatpush1.msra.mxu0 0.0
    %657 = vmatprep.subr.mxu0 0.0
    %658 = vmatpush1.msra.mxu0 0.0
    %659 = vmatprep.subr.mxu0 0.0
    %660 = vmatpush1.msra.mxu0 0.0
    %661 = vmatprep.subr.mxu0 0.0
    %662 = vmatpush1.msra.mxu0 0.0
    %663 = vmatprep.subr.mxu0 0.0
    %664 = vmatpush1.msra.mxu0 0.0
    %665 = vmatprep.subr.mxu0 0.0
    %666 = vmatpush1.msra.mxu0 0.0
    %667 = vmatprep.subr.mxu0 0.0
    %668 = vmatpush1.msra.mxu0 0.0
    %669 = vmatprep.subr.mxu0 0.0
    %670 = vmatpush1.msra.mxu0 0.0
    %671 = vmatprep.subr.mxu0 0.0
    %672 = vmatpush1.msra.mxu0 0.0
    %673 = vmatprep.subr.mxu0 0.0
    %674 = vmatpush1.msra.mxu0 0.0
    %675 = vmatprep.subr.mxu0 0.0
    %676 = vmatpush1.msra.mxu0 0.0
    %677 = vmatprep.subr.mxu0 0.0
    %678 = vmatpush1.msra.mxu0 0.0
    %679 = vmatprep.subr.mxu0 0.0
    %680 = vmatpush1.msra.mxu0 0.0
    %681 = vmatprep.subr.mxu0 0.0
    %682 = vmatpush1.msra.mxu0 0.0
    %683 = vmatprep.subr.mxu0 0.0
    %684 = vmatpush1.msra.mxu0 0.0
    %685 = vmatprep.subr.mxu0 0.0
    %686 = vmatpush1.msra.mxu0 0.0
    %687 = vmatprep.subr.mxu0 0.0
    %688 = vmatpush1.msra.mxu0 0.0
    %689 = vmatprep.subr.mxu0 0.0
    %690 = vmatpush1.msra.mxu0 0.0
    %691 = vmatprep.mubr.f32.mxu0 0.0
    %692 = vmatmul.mubr.f32.gmra.mrb[0].mxu0 %v64
    %v693 = vpop.f32.mrb[0].mxu0
    %v694 = vadd.f32 0.0, %v693
    %v695 = vpop.f32.mrb[0].mxu0
    %696 = vmatprep.mubr.f32.mxu0 0.0
    %697 = vmatmul.mubr.f32.gmra.mrb[0].mxu0 %v67
    %v698 = vpop.f32.mrb[0].mxu0
    %v699 = vadd.f32 0.0, %v698
    %v700 = vpop.f32.mrb[0].mxu0
    %701 = vmatprep.mubr.f32.mxu0 0.0
    %702 = vmatmul.mubr.f32.gmra.mrb[0].mxu0 %v70
    %v703 = vpop.f32.mrb[0].mxu0
    %v704 = vadd.f32 0.0, %v703
    %v705 = vpop.f32.mrb[0].mxu0
    %706 = vmatprep.mubr.f32.mxu0 0.0
    %707 = vmatmul.mubr.f32.gmra.mrb[0].mxu0 %v283
    %v708 = vpop.f32.mrb[0].mxu0
    %v709 = vadd.f32 0.0, %v708
    %v710 = vpop.f32.mrb[0].mxu0
    %711 = vmatprep.mubr.f32.mxu0 0.0
    %712 = vmatmul.mubr.f32.gmra.mrb[0].mxu0 %v396
    %v713 = vpop.f32.mrb[0].mxu0
    %v714 = vadd.f32 0.0, %v713
    %v715 = vpop.f32.mrb[0].mxu0
    %716 = vmatprep.mubr.f32.mxu0 0.0
    %717 = vmatmul.mubr.f32.gmra.mrb[0].mxu0 %v509
    %v718 = vpop.f32.mrb[0].mxu0
    %v719 = vadd.f32 0.0, %v718
    %v720 = vpop.f32.mrb[0].mxu0
    %721 = vmatprep.mubr.f32.mxu0 0.0
    %722 = vmatmul.mubr.f32.gmra.mrb[0].mxu0 %v622
    %v723 = vpop.f32.mrb[0].mxu0
    %v724 = vadd.f32 0.0, %v723
    %v725 = vpop.f32.mrb[0].mxu0
    %726 = vdwg.mxu0
    %v727 = vadd.f32 %v614, %v694
    %v728 = vadd.f32 %v615, %v699
    %v729 = vadd.f32 %v616, %v704
    %v730 = vadd.f32 %v617, %v709
    %v731 = vadd.f32 %v618, %v714
    %v732 = vadd.f32 %v619, %v719
    %v733 = vadd.f32 %v620, %v724
    %v735 = vsel %vm50, %v36, 0
    %v738 = vsel %vm72, %v46, 0
    %740 = vmatprep.subr.mxu0 0.0
    %741 = vmatpush1.msra.mxu0 %v738
    %742 = vmatprep.subr.mxu0 0.0
    %743 = vmatpush1.msra.mxu0 0.0
    %744 = vmatprep.subr.mxu0 0.0
    %745 = vmatpush1.msra.mxu0 0.0
    %746 = vmatprep.subr.mxu0 0.0
    %747 = vmatpush1.msra.mxu0 0.0
    %748 = vmatprep.subr.mxu0 0.0
    %749 = vmatpush1.msra.mxu0 0.0
    %750 = vmatprep.subr.mxu0 0.0
    %751 = vmatpush1.msra.mxu0 0.0
    %752 = vmatprep.subr.mxu0 0.0
    %753 = vmatpush1.msra.mxu0 0.0
    %754 = vmatprep.subr.mxu0 0.0
    %755 = vmatpush1.msra.mxu0 0.0
    %756 = vmatprep.subr.mxu0 0.0
    %757 = vmatpush1.msra.mxu0 0.0
    %758 = vmatprep.subr.mxu0 0.0
    %759 = vmatpush1.msra.mxu0 0.0
    %760 = vmatprep.subr.mxu0 0.0
    %761 = vmatpush1.msra.mxu0 0.0
    %762 = vmatprep.subr.mxu0 0.0
    %763 = vmatpush1.msra.mxu0 0.0
    %764 = vmatprep.subr.mxu0 0.0
    %765 = vmatpush1.msra.mxu0 0.0
    %766 = vmatprep.subr.mxu0 0.0
    %767 = vmatpush1.msra.mxu0 0.0
    %768 = vmatprep.subr.mxu0 0.0
    %769 = vmatpush1.msra.mxu0 0.0
    %770 = vmatprep.subr.mxu0 0.0
    %771 = vmatpush1.msra.mxu0 0.0
    %772 = vmatprep.subr.mxu0 0.0
    %773 = vmatpush1.msra.mxu0 0.0
    %774 = vmatprep.subr.mxu0 0.0
    %775 = vmatpush1.msra.mxu0 0.0
    %776 = vmatprep.subr.mxu0 0.0
    %777 = vmatpush1.msra.mxu0 0.0
    %778 = vmatprep.subr.mxu0 0.0
    %779 = vmatpush1.msra.mxu0 0.0
    %780 = vmatprep.subr.mxu0 0.0
    %781 = vmatpush1.msra.mxu0 0.0
    %782 = vmatprep.subr.mxu0 0.0
    %783 = vmatpush1.msra.mxu0 0.0
    %784 = vmatprep.subr.mxu0 0.0
    %785 = vmatpush1.msra.mxu0 0.0
    %786 = vmatprep.subr.mxu0 0.0
    %787 = vmatpush1.msra.mxu0 0.0
    %788 = vmatprep.subr.mxu0 0.0
    %789 = vmatpush1.msra.mxu0 0.0
    %790 = vmatprep.subr.mxu0 0.0
    %791 = vmatpush1.msra.mxu0 0.0
    %792 = vmatprep.subr.mxu0 0.0
    %793 = vmatpush1.msra.mxu0 0.0
    %794 = vmatprep.subr.mxu0 0.0
    %795 = vmatpush1.msra.mxu0 0.0
    %796 = vmatprep.subr.mxu0 0.0
    %797 = vmatpush1.msra.mxu0 0.0
    %798 = vmatprep.subr.mxu0 0.0
    %799 = vmatpush1.msra.mxu0 0.0
    %800 = vmatprep.subr.mxu0 0.0
    %801 = vmatpush1.msra.mxu0 0.0
    %802 = vmatprep.subr.mxu0 0.0
    %803 = vmatpush1.msra.mxu0 0.0
    %804 = vmatprep.mubr.f32.mxu0 0.0
    %805 = vmatmul.mubr.f32.gmra.mrb[0].mxu0 %v67
    %v806 = vpop.f32.mrb[0].mxu0
    %v807 = vadd.f32 0.0, %v806
    %v808 = vpop.f32.mrb[0].mxu0
    %809 = vmatprep.mubr.f32.mxu0 0.0
    %810 = vmatmul.mubr.f32.gmra.mrb[0].mxu0 %v70
    %v811 = vpop.f32.mrb[0].mxu0
    %v812 = vadd.f32 0.0, %v811
    %v813 = vpop.f32.mrb[0].mxu0
    %814 = vmatprep.mubr.f32.mxu0 0.0
    %815 = vmatmul.mubr.f32.gmra.mrb[0].mxu0 %v283
    %v816 = vpop.f32.mrb[0].mxu0
    %v817 = vadd.f32 0.0, %v816
    %v818 = vpop.f32.mrb[0].mxu0
    %819 = vmatprep.mubr.f32.mxu0 0.0
    %820 = vmatmul.mubr.f32.gmra.mrb[0].mxu0 %v396
    %v821 = vpop.f32.mrb[0].mxu0
    %v822 = vadd.f32 0.0, %v821
    %v823 = vpop.f32.mrb[0].mxu0
    %824 = vmatprep.mubr.f32.mxu0 0.0
    %825 = vmatmul.mubr.f32.gmra.mrb[0].mxu0 %v509
    %v826 = vpop.f32.mrb[0].mxu0
    %v827 = vadd.f32 0.0, %v826
    %v828 = vpop.f32.mrb[0].mxu0
    %829 = vmatprep.mubr.f32.mxu0 0.0
    %830 = vmatmul.mubr.f32.gmra.mrb[0].mxu0 %v622
    %v831 = vpop.f32.mrb[0].mxu0
    %v832 = vadd.f32 0.0, %v831
    %v833 = vpop.f32.mrb[0].mxu0
    %834 = vmatprep.mubr.f32.mxu0 0.0
    %835 = vmatmul.mubr.f32.gmra.mrb[0].mxu0 %v735
    %v836 = vpop.f32.mrb[0].mxu0
    %v837 = vadd.f32 0.0, %v836
    %v838 = vpop.f32.mrb[0].mxu0
    %839 = vdwg.mxu0
    %v840 = vadd.f32 %v727, %v807
    %v841 = vadd.f32 %v728, %v812
    %v842 = vadd.f32 %v729, %v817
    %v843 = vadd.f32 %v730, %v822
    %v844 = vadd.f32 %v731, %v827
    %v845 = vadd.f32 %v732, %v832
    %v846 = vadd.f32 %v733, %v837
    %v848 = vsel %vm50, %v37, 0
    %v851 = vsel %vm72, %v47, 0
    %853 = vmatprep.subr.mxu0 0.0
    %854 = vmatpush1.msra.mxu0 %v851
    %855 = vmatprep.subr.mxu0 0.0
    %856 = vmatpush1.msra.mxu0 0.0
    %857 = vmatprep.subr.mxu0 0.0
    %858 = vmatpush1.msra.mxu0 0.0
    %859 = vmatprep.subr.mxu0 0.0
    %860 = vmatpush1.msra.mxu0 0.0
    %861 = vmatprep.subr.mxu0 0.0
    %862 = vmatpush1.msra.mxu0 0.0
    %863 = vmatprep.subr.mxu0 0.0
    %864 = vmatpush1.msra.mxu0 0.0
    %865 = vmatprep.subr.mxu0 0.0
    %866 = vmatpush1.msra.mxu0 0.0
    %867 = vmatprep.subr.mxu0 0.0
    %868 = vmatpush1.msra.mxu0 0.0
    %869 = vmatprep.subr.mxu0 0.0
    %870 = vmatpush1.msra.mxu0 0.0
    %871 = vmatprep.subr.mxu0 0.0
    %872 = vmatpush1.msra.mxu0 0.0
    %873 = vmatprep.subr.mxu0 0.0
    %874 = vmatpush1.msra.mxu0 0.0
    %875 = vmatprep.subr.mxu0 0.0
    %876 = vmatpush1.msra.mxu0 0.0
    %877 = vmatprep.subr.mxu0 0.0
    %878 = vmatpush1.msra.mxu0 0.0
    %879 = vmatprep.subr.mxu0 0.0
    %880 = vmatpush1.msra.mxu0 0.0
    %881 = vmatprep.subr.mxu0 0.0
    %882 = vmatpush1.msra.mxu0 0.0
    %883 = vmatprep.subr.mxu0 0.0
    %884 = vmatpush1.msra.mxu0 0.0
    %885 = vmatprep.subr.mxu0 0.0
    %886 = vmatpush1.msra.mxu0 0.0
    %887 = vmatprep.subr.mxu0 0.0
    %888 = vmatpush1.msra.mxu0 0.0
    %889 = vmatprep.subr.mxu0 0.0
    %890 = vmatpush1.msra.mxu0 0.0
    %891 = vmatprep.subr.mxu0 0.0
    %892 = vmatpush1.msra.mxu0 0.0
    %893 = vmatprep.subr.mxu0 0.0
    %894 = vmatpush1.msra.mxu0 0.0
    %895 = vmatprep.subr.mxu0 0.0
    %896 = vmatpush1.msra.mxu0 0.0
    %897 = vmatprep.subr.mxu0 0.0
    %898 = vmatpush1.msra.mxu0 0.0
    %899 = vmatprep.subr.mxu0 0.0
    %900 = vmatpush1.msra.mxu0 0.0
    %901 = vmatprep.subr.mxu0 0.0
    %902 = vmatpush1.msra.mxu0 0.0
    %903 = vmatprep.subr.mxu0 0.0
    %904 = vmatpush1.msra.mxu0 0.0
    %905 = vmatprep.subr.mxu0 0.0
    %906 = vmatpush1.msra.mxu0 0.0
    %907 = vmatprep.subr.mxu0 0.0
    %908 = vmatpush1.msra.mxu0 0.0
    %909 = vmatprep.subr.mxu0 0.0
    %910 = vmatpush1.msra.mxu0 0.0
    %911 = vmatprep.subr.mxu0 0.0
    %912 = vmatpush1.msra.mxu0 0.0
    %913 = vmatprep.subr.mxu0 0.0
    %914 = vmatpush1.msra.mxu0 0.0
    %915 = vmatprep.subr.mxu0 0.0
    %916 = vmatpush1.msra.mxu0 0.0
    %917 = vmatprep.mubr.f32.mxu0 0.0
    %918 = vmatmul.mubr.f32.gmra.mrb[0].mxu0 %v70
    %v919 = vpop.f32.mrb[0].mxu0
    %v920 = vadd.f32 0.0, %v919
    %v921 = vpop.f32.mrb[0].mxu0
    %922 = vmatprep.mubr.f32.mxu0 0.0
    %923 = vmatmul.mubr.f32.gmra.mrb[0].mxu0 %v283
    %v924 = vpop.f32.mrb[0].mxu0
    %v925 = vadd.f32 0.0, %v924
    %v926 = vpop.f32.mrb[0].mxu0
    %927 = vmatprep.mubr.f32.mxu0 0.0
    %928 = vmatmul.mubr.f32.gmra.mrb[0].mxu0 %v396
    %v929 = vpop.f32.mrb[0].mxu0
    %v930 = vadd.f32 0.0, %v929
    %v931 = vpop.f32.mrb[0].mxu0
    %932 = vmatprep.mubr.f32.mxu0 0.0
    %933 = vmatmul.mubr.f32.gmra.mrb[0].mxu0 %v509
    %v934 = vpop.f32.mrb[0].mxu0
    %v935 = vadd.f32 0.0, %v934
    %v936 = vpop.f32.mrb[0].mxu0
    %937 = vmatprep.mubr.f32.mxu0 0.0
    %938 = vmatmul.mubr.f32.gmra.mrb[0].mxu0 %v622
    %v939 = vpop.f32.mrb[0].mxu0
    %v940 = vadd.f32 0.0, %v939
    %v941 = vpop.f32.mrb[0].mxu0
    %942 = vmatprep.mubr.f32.mxu0 0.0
    %943 = vmatmul.mubr.f32.gmra.mrb[0].mxu0 %v735
    %v944 = vpop.f32.mrb[0].mxu0
    %v945 = vadd.f32 0.0, %v944
    %v946 = vpop.f32.mrb[0].mxu0
    %947 = vmatprep.mubr.f32.mxu0 0.0
    %948 = vmatmul.mubr.f32.gmra.mrb[0].mxu0 %v848
    %v949 = vpop.f32.mrb[0].mxu0
    %v950 = vadd.f32 0.0, %v949
    %v951 = vpop.f32.mrb[0].mxu0
    %952 = vdwg.mxu0
    %v953 = vadd.f32 %v840, %v920
    %v954 = vadd.f32 %v841, %v925
    %v955 = vadd.f32 %v842, %v930
    %v956 = vadd.f32 %v843, %v935
    %v957 = vadd.f32 %v844, %v940
    %v958 = vadd.f32 %v845, %v945
    %v959 = vadd.f32 %v846, %v950
    %v961 = vsel %vm50, %v38, 0
    %v964 = vsel %vm72, %v48, 0
    %966 = vmatprep.subr.mxu0 0.0
    %967 = vmatpush1.msra.mxu0 %v964
    %968 = vmatprep.subr.mxu0 0.0
    %969 = vmatpush1.msra.mxu0 0.0
    %970 = vmatprep.subr.mxu0 0.0
    %971 = vmatpush1.msra.mxu0 0.0
    %972 = vmatprep.subr.mxu0 0.0
    %973 = vmatpush1.msra.mxu0 0.0
    %974 = vmatprep.subr.mxu0 0.0
    %975 = vmatpush1.msra.mxu0 0.0
    %976 = vmatprep.subr.mxu0 0.0
    %977 = vmatpush1.msra.mxu0 0.0
    %978 = vmatprep.subr.mxu0 0.0
    %979 = vmatpush1.msra.mxu0 0.0
    %980 = vmatprep.subr.mxu0 0.0
    %981 = vmatpush1.msra.mxu0 0.0
    %982 = vmatprep.subr.mxu0 0.0
    %983 = vmatpush1.msra.mxu0 0.0
    %984 = vmatprep.subr.mxu0 0.0
    %985 = vmatpush1.msra.mxu0 0.0
    %986 = vmatprep.subr.mxu0 0.0
    %987 = vmatpush1.msra.mxu0 0.0
    %988 = vmatprep.subr.mxu0 0.0
    %989 = vmatpush1.msra.mxu0 0.0
    %990 = vmatprep.subr.mxu0 0.0
    %991 = vmatpush1.msra.mxu0 0.0
    %992 = vmatprep.subr.mxu0 0.0
    %993 = vmatpush1.msra.mxu0 0.0
    %994 = vmatprep.subr.mxu0 0.0
    %995 = vmatpush1.msra.mxu0 0.0
    %996 = vmatprep.subr.mxu0 0.0
    %997 = vmatpush1.msra.mxu0 0.0
    %998 = vmatprep.subr.mxu0 0.0
    %999 = vmatpush1.msra.mxu0 0.0
    %1000 = vmatprep.subr.mxu0 0.0
    %1001 = vmatpush1.msra.mxu0 0.0
    %1002 = vmatprep.subr.mxu0 0.0
    %1003 = vmatpush1.msra.mxu0 0.0
    %1004 = vmatprep.subr.mxu0 0.0
    %1005 = vmatpush1.msra.mxu0 0.0
    %1006 = vmatprep.subr.mxu0 0.0
    %1007 = vmatpush1.msra.mxu0 0.0
    %1008 = vmatprep.subr.mxu0 0.0
    %1009 = vmatpush1.msra.mxu0 0.0
    %1010 = vmatprep.subr.mxu0 0.0
    %1011 = vmatpush1.msra.mxu0 0.0
    %1012 = vmatprep.subr.mxu0 0.0
    %1013 = vmatpush1.msra.mxu0 0.0
    %1014 = vmatprep.subr.mxu0 0.0
    %1015 = vmatpush1.msra.mxu0 0.0
    %1016 = vmatprep.subr.mxu0 0.0
    %1017 = vmatpush1.msra.mxu0 0.0
    %1018 = vmatprep.subr.mxu0 0.0
    %1019 = vmatpush1.msra.mxu0 0.0
    %1020 = vmatprep.subr.mxu0 0.0
    %1021 = vmatpush1.msra.mxu0 0.0
    %1022 = vmatprep.subr.mxu0 0.0
    %1023 = vmatpush1.msra.mxu0 0.0
    %1024 = vmatprep.subr.mxu0 0.0
    %1025 = vmatpush1.msra.mxu0 0.0
    %1026 = vmatprep.subr.mxu0 0.0
    %1027 = vmatpush1.msra.mxu0 0.0
    %1028 = vmatprep.subr.mxu0 0.0
    %1029 = vmatpush1.msra.mxu0 0.0
    %1030 = vmatprep.mubr.f32.mxu0 0.0
    %1031 = vmatmul.mubr.f32.gmra.mrb[0].mxu0 %v283
    %v1032 = vpop.f32.mrb[0].mxu0
    %v1033 = vadd.f32 0.0, %v1032
    %v1034 = vpop.f32.mrb[0].mxu0
    %1035 = vmatprep.mubr.f32.mxu0 0.0
    %1036 = vmatmul.mubr.f32.gmra.mrb[0].mxu0 %v396
    %v1037 = vpop.f32.mrb[0].mxu0
    %v1038 = vadd.f32 0.0, %v1037
    %v1039 = vpop.f32.mrb[0].mxu0
    %1040 = vmatprep.mubr.f32.mxu0 0.0
    %1041 = vmatmul.mubr.f32.gmra.mrb[0].mxu0 %v509
    %v1042 = vpop.f32.mrb[0].mxu0
    %v1043 = vadd.f32 0.0, %v1042
    %v1044 = vpop.f32.mrb[0].mxu0
    %1045 = vmatprep.mubr.f32.mxu0 0.0
    %1046 = vmatmul.mubr.f32.gmra.mrb[0].mxu0 %v622
    %v1047 = vpop.f32.mrb[0].mxu0
    %v1048 = vadd.f32 0.0, %v1047
    %v1049 = vpop.f32.mrb[0].mxu0
    %1050 = vmatprep.mubr.f32.mxu0 0.0
    %1051 = vmatmul.mubr.f32.gmra.mrb[0].mxu0 %v735
    %v1052 = vpop.f32.mrb[0].mxu0
    %v1053 = vadd.f32 0.0, %v1052
    %v1054 = vpop.f32.mrb[0].mxu0
    %1055 = vmatprep.mubr.f32.mxu0 0.0
    %1056 = vmatmul.mubr.f32.gmra.mrb[0].mxu0 %v848
    %v1057 = vpop.f32.mrb[0].mxu0
    %v1058 = vadd.f32 0.0, %v1057
    %v1059 = vpop.f32.mrb[0].mxu0
    %1060 = vmatprep.mubr.f32.mxu0 0.0
    %1061 = vmatmul.mubr.f32.gmra.mrb[0].mxu0 %v961
    %v1062 = vpop.f32.mrb[0].mxu0
    %v1063 = vadd.f32 0.0, %v1062
    %v1064 = vpop.f32.mrb[0].mxu0
    %1065 = vdwg.mxu0
    %v1066 = vadd.f32 %v953, %v1033
    %v1067 = vadd.f32 %v954, %v1038
    %v1068 = vadd.f32 %v955, %v1043
    %v1069 = vadd.f32 %v956, %v1048
    %v1070 = vadd.f32 %v957, %v1053
    %v1071 = vadd.f32 %v958, %v1058
    %v1072 = vadd.f32 %v959, %v1063
    %v1074 = vsel %vm50, %v39, 0
    %v1077 = vsel %vm72, %v49, 0
    %1079 = vmatprep.subr.mxu0 0.0
    %1080 = vmatpush1.msra.mxu0 %v1077
    %1081 = vmatprep.subr.mxu0 0.0
    %1082 = vmatpush1.msra.mxu0 0.0
    %1083 = vmatprep.subr.mxu0 0.0
    %1084 = vmatpush1.msra.mxu0 0.0
    %1085 = vmatprep.subr.mxu0 0.0
    %1086 = vmatpush1.msra.mxu0 0.0
    %1087 = vmatprep.subr.mxu0 0.0
    %1088 = vmatpush1.msra.mxu0 0.0
    %1089 = vmatprep.subr.mxu0 0.0
    %1090 = vmatpush1.msra.mxu0 0.0
    %1091 = vmatprep.subr.mxu0 0.0
    %1092 = vmatpush1.msra.mxu0 0.0
    %1093 = vmatprep.subr.mxu0 0.0
    %1094 = vmatpush1.msra.mxu0 0.0
    %1095 = vmatprep.subr.mxu0 0.0
    %1096 = vmatpush1.msra.mxu0 0.0
    %1097 = vmatprep.subr.mxu0 0.0
    %1098 = vmatpush1.msra.mxu0 0.0
    %1099 = vmatprep.subr.mxu0 0.0
    %1100 = vmatpush1.msra.mxu0 0.0
    %1101 = vmatprep.subr.mxu0 0.0
    %1102 = vmatpush1.msra.mxu0 0.0
    %1103 = vmatprep.subr.mxu0 0.0
    %1104 = vmatpush1.msra.mxu0 0.0
    %1105 = vmatprep.subr.mxu0 0.0
    %1106 = vmatpush1.msra.mxu0 0.0
    %1107 = vmatprep.subr.mxu0 0.0
    %1108 = vmatpush1.msra.mxu0 0.0
    %1109 = vmatprep.subr.mxu0 0.0
    %1110 = vmatpush1.msra.mxu0 0.0
    %1111 = vmatprep.subr.mxu0 0.0
    %1112 = vmatpush1.msra.mxu0 0.0
    %1113 = vmatprep.subr.mxu0 0.0
    %1114 = vmatpush1.msra.mxu0 0.0
    %1115 = vmatprep.subr.mxu0 0.0
    %1116 = vmatpush1.msra.mxu0 0.0
    %1117 = vmatprep.subr.mxu0 0.0
    %1118 = vmatpush1.msra.mxu0 0.0
    %1119 = vmatprep.subr.mxu0 0.0
    %1120 = vmatpush1.msra.mxu0 0.0
    %1121 = vmatprep.subr.mxu0 0.0
    %1122 = vmatpush1.msra.mxu0 0.0
    %1123 = vmatprep.subr.mxu0 0.0
    %1124 = vmatpush1.msra.mxu0 0.0
    %1125 = vmatprep.subr.mxu0 0.0
    %1126 = vmatpush1.msra.mxu0 0.0
    %1127 = vmatprep.subr.mxu0 0.0
    %1128 = vmatpush1.msra.mxu0 0.0
    %1129 = vmatprep.subr.mxu0 0.0
    %1130 = vmatpush1.msra.mxu0 0.0
    %1131 = vmatprep.subr.mxu0 0.0
    %1132 = vmatpush1.msra.mxu0 0.0
    %1133 = vmatprep.subr.mxu0 0.0
    %1134 = vmatpush1.msra.mxu0 0.0
    %1135 = vmatprep.subr.mxu0 0.0
    %1136 = vmatpush1.msra.mxu0 0.0
    %1137 = vmatprep.subr.mxu0 0.0
    %1138 = vmatpush1.msra.mxu0 0.0
    %1139 = vmatprep.subr.mxu0 0.0
    %1140 = vmatpush1.msra.mxu0 0.0
    %1141 = vmatprep.subr.mxu0 0.0
    %1142 = vmatpush1.msra.mxu0 0.0
    %1143 = vmatprep.mubr.f32.mxu0 0.0
    %1144 = vmatmul.mubr.f32.gmra.mrb[0].mxu0 %v396
    %v1145 = vpop.f32.mrb[0].mxu0
    %v1146 = vadd.f32 0.0, %v1145
    %v1147 = vpop.f32.mrb[0].mxu0
    %1148 = vmatprep.mubr.f32.mxu0 0.0
    %1149 = vmatmul.mubr.f32.gmra.mrb[0].mxu0 %v509
    %v1150 = vpop.f32.mrb[0].mxu0
    %v1151 = vadd.f32 0.0, %v1150
    %v1152 = vpop.f32.mrb[0].mxu0
    %1153 = vmatprep.mubr.f32.mxu0 0.0
    %1154 = vmatmul.mubr.f32.gmra.mrb[0].mxu0 %v622
    %v1155 = vpop.f32.mrb[0].mxu0
    %v1156 = vadd.f32 0.0, %v1155
    %v1157 = vpop.f32.mrb[0].mxu0
    %1158 = vmatprep.mubr.f32.mxu0 0.0
    %1159 = vmatmul.mubr.f32.gmra.mrb[0].mxu0 %v735
    %v1160 = vpop.f32.mrb[0].mxu0
    %v1161 = vadd.f32 0.0, %v1160
    %v1162 = vpop.f32.mrb[0].mxu0
    %1163 = vmatprep.mubr.f32.mxu0 0.0
    %1164 = vmatmul.mubr.f32.gmra.mrb[0].mxu0 %v848
    %v1165 = vpop.f32.mrb[0].mxu0
    %v1166 = vadd.f32 0.0, %v1165
    %v1167 = vpop.f32.mrb[0].mxu0
    %1168 = vmatprep.mubr.f32.mxu0 0.0
    %1169 = vmatmul.mubr.f32.gmra.mrb[0].mxu0 %v961
    %v1170 = vpop.f32.mrb[0].mxu0
    %v1171 = vadd.f32 0.0, %v1170
    %v1172 = vpop.f32.mrb[0].mxu0
    %1173 = vmatprep.mubr.f32.mxu0 0.0
    %1174 = vmatmul.mubr.f32.gmra.mrb[0].mxu0 %v1074
    %v1175 = vpop.f32.mrb[0].mxu0
    %v1176 = vadd.f32 0.0, %v1175
    %v1177 = vpop.f32.mrb[0].mxu0
    %1178 = vdwg.mxu0
    %v1179 = vadd.f32 %v1066, %v1146
    %v1180 = vadd.f32 %v1067, %v1151
    %v1181 = vadd.f32 %v1068, %v1156
    %v1182 = vadd.f32 %v1069, %v1161
    %v1183 = vadd.f32 %v1070, %v1166
    %v1184 = vadd.f32 %v1071, %v1171
    %v1185 = vadd.f32 %v1072, %v1176
    %v1186 = vld [vmem:[%s2] sm:$0x1]
    %v1188 = vlaneseq
    %v1189 = vshrl.u32 %v1188, 7
    %v1190 = vsub.s32 0, %v1189
    %v1191 = vrot.slane %v1186, %v1190
    %v1193 = vadd.f32 %v1179, %v1191
    %v1194 = vadd.f32 %v1180, %v1191
    %v1195 = vadd.f32 %v1181, %v1191
    %v1196 = vadd.f32 %v1182, %v1191
    %v1197 = vadd.f32 %v1183, %v1191
    %v1198 = vadd.f32 %v1184, %v1191
    %v1199 = vadd.f32 %v1185, %v1191
    %v1200 = vmax.f32 %v1193, 0.0
    %v1201 = vmax.f32 %v1194, 0.0
    %v1202 = vmax.f32 %v1195, 0.0
    %v1203 = vmax.f32 %v1196, 0.0
    %v1204 = vmax.f32 %v1197, 0.0
    %v1205 = vmax.f32 %v1198, 0.0
    %v1206 = vmax.f32 %v1199, 0.0
    %v1207 = vld [vmem:[%s3] sm:$0xff]
    %v1208 = vld [vmem:[%s3 + $0x8] sm:$0xf]
    %v1209 = vld [vmem:[%s5] sm:$0x1]
    %v1211 = vlaneseq
    %v1212 = vshrl.u32 %v1211, 7
    %v1213 = vsub.s32 0, %v1212
    %v1214 = vrot.slane %v1209, %v1213
    %vm1216 = vcmask 97280
    %v1218 = vsel %vm1216, %v1200, 0
    %v1221 = vsel %vm1216, %v1201, 0
    %v1224 = vsel %vm1216, %v1202, 0
    %v1227 = vsel %vm1216, %v1203, 0
    %v1230 = vsel %vm1216, %v1204, 0
    %v1233 = vsel %vm1216, %v1205, 0
    %v1236 = vsel %vm1216, %v1206, 0
    %v1239 = vsel %vm72, %v1208, 0
    %1241 = vmatprep.subr.mxu0 0.0
    %1242 = vmatpush1.msra.mxu0 %v1207
    %1243 = vmatprep.subr.mxu0 0.0
    %1244 = vmatpush1.msra.mxu0 %v1239
    %1245 = vmatprep.subr.mxu0 0.0
    %1246 = vmatpush1.msra.mxu0 0.0
    %1247 = vmatprep.subr.mxu0 0.0
    %1248 = vmatpush1.msra.mxu0 0.0
    %1249 = vmatprep.subr.mxu0 0.0
    %1250 = vmatpush1.msra.mxu0 0.0
    %1251 = vmatprep.subr.mxu0 0.0
    %1252 = vmatpush1.msra.mxu0 0.0
    %1253 = vmatprep.subr.mxu0 0.0
    %1254 = vmatpush1.msra.mxu0 0.0
    %1255 = vmatprep.subr.mxu0 0.0
    %1256 = vmatpush1.msra.mxu0 0.0
    %1257 = vmatprep.subr.mxu0 0.0
    %1258 = vmatpush1.msra.mxu0 0.0
    %1259 = vmatprep.subr.mxu0 0.0
    %1260 = vmatpush1.msra.mxu0 0.0
    %1261 = vmatprep.subr.mxu0 0.0
    %1262 = vmatpush1.msra.mxu0 0.0
    %1263 = vmatprep.subr.mxu0 0.0
    %1264 = vmatpush1.msra.mxu0 0.0
    %1265 = vmatprep.subr.mxu0 0.0
    %1266 = vmatpush1.msra.mxu0 0.0
    %1267 = vmatprep.subr.mxu0 0.0
    %1268 = vmatpush1.msra.mxu0 0.0
    %1269 = vmatprep.subr.mxu0 0.0
    %1270 = vmatpush1.msra.mxu0 0.0
    %1271 = vmatprep.subr.mxu0 0.0
    %1272 = vmatpush1.msra.mxu0 0.0
    %1273 = vmatprep.subr.mxu0 0.0
    %1274 = vmatpush1.msra.mxu0 0.0
    %1275 = vmatprep.subr.mxu0 0.0
    %1276 = vmatpush1.msra.mxu0 0.0
    %1277 = vmatprep.subr.mxu0 0.0
    %1278 = vmatpush1.msra.mxu0 0.0
    %1279 = vmatprep.subr.mxu0 0.0
    %1280 = vmatpush1.msra.mxu0 0.0
    %1281 = vmatprep.subr.mxu0 0.0
    %1282 = vmatpush1.msra.mxu0 0.0
    %1283 = vmatprep.subr.mxu0 0.0
    %1284 = vmatpush1.msra.mxu0 0.0
    %1285 = vmatprep.subr.mxu0 0.0
    %1286 = vmatpush1.msra.mxu0 0.0
    %1287 = vmatprep.subr.mxu0 0.0
    %1288 = vmatpush1.msra.mxu0 0.0
    %1289 = vmatprep.subr.mxu0 0.0
    %1290 = vmatpush1.msra.mxu0 0.0
    %1291 = vmatprep.subr.mxu0 0.0
    %1292 = vmatpush1.msra.mxu0 0.0
    %1293 = vmatprep.subr.mxu0 0.0
    %1294 = vmatpush1.msra.mxu0 0.0
    %1295 = vmatprep.subr.mxu0 0.0
    %1296 = vmatpush1.msra.mxu0 0.0
    %1297 = vmatprep.subr.mxu0 0.0
    %1298 = vmatpush1.msra.mxu0 0.0
    %1299 = vmatprep.subr.mxu0 0.0
    %1300 = vmatpush1.msra.mxu0 0.0
    %1301 = vmatprep.subr.mxu0 0.0
    %1302 = vmatpush1.msra.mxu0 0.0
    %1303 = vmatprep.subr.mxu0 0.0
    %1304 = vmatpush1.msra.mxu0 0.0
    %1305 = vmatprep.mubr.f32.mxu0 0.0
    %1306 = vmatmul.mubr.f32.gmra.mrb[0].mxu0 %v1218
    %v1307 = vpop.f32.mrb[0].mxu0
    %v1308 = vadd.f32 %v1214, %v1307
    %v1309 = vpop.f32.mrb[0].mxu0
    %1310 = vmatprep.mubr.f32.mxu0 0.0
    %1311 = vmatmul.mubr.f32.gmra.mrb[0].mxu0 %v1221
    %v1312 = vpop.f32.mrb[0].mxu0
    %v1313 = vadd.f32 %v1214, %v1312
    %v1314 = vpop.f32.mrb[0].mxu0
    %1315 = vmatprep.mubr.f32.mxu0 0.0
    %1316 = vmatmul.mubr.f32.gmra.mrb[0].mxu0 %v1224
    %v1317 = vpop.f32.mrb[0].mxu0
    %v1318 = vadd.f32 %v1214, %v1317
    %v1319 = vpop.f32.mrb[0].mxu0
    %1320 = vmatprep.mubr.f32.mxu0 0.0
    %1321 = vmatmul.mubr.f32.gmra.mrb[0].mxu0 %v1227
    %v1322 = vpop.f32.mrb[0].mxu0
    %v1323 = vadd.f32 %v1214, %v1322
    %v1324 = vpop.f32.mrb[0].mxu0
    %1325 = vmatprep.mubr.f32.mxu0 0.0
    %1326 = vmatmul.mubr.f32.gmra.mrb[0].mxu0 %v1230
    %v1327 = vpop.f32.mrb[0].mxu0
    %v1328 = vadd.f32 %v1214, %v1327
    %v1329 = vpop.f32.mrb[0].mxu0
    %1330 = vmatprep.mubr.f32.mxu0 0.0
    %1331 = vmatmul.mubr.f32.gmra.mrb[0].mxu0 %v1233
    %v1332 = vpop.f32.mrb[0].mxu0
    %v1333 = vadd.f32 %v1214, %v1332
    %v1334 = vpop.f32.mrb[0].mxu0
    %1335 = vmatprep.mubr.f32.mxu0 0.0
    %1336 = vmatmul.mubr.f32.gmra.mrb[0].mxu0 %v1236
    %v1337 = vpop.f32.mrb[0].mxu0
    %v1338 = vadd.f32 %v1214, %v1337
    %v1339 = vpop.f32.mrb[0].mxu0
    %1340 = vdwg.mxu0
    %v1341 = vld [vmem:[%s4] sm:$0xff]
    %v1342 = vld [vmem:[%s4 + $0x8] sm:$0xf]
    %v1344 = vsel %vm1216, 0.0, 0
    %v1347 = vsel %vm72, %v1342, 0
    %1349 = vmatprep.subr.mxu0 0.0
    %1350 = vmatpush1.msra.mxu0 %v1341
    %1351 = vmatprep.subr.mxu0 0.0
    %1352 = vmatpush1.msra.mxu0 %v1347
    %1353 = vmatprep.subr.mxu0 0.0
    %1354 = vmatpush1.msra.mxu0 0.0
    %1355 = vmatprep.subr.mxu0 0.0
    %1356 = vmatpush1.msra.mxu0 0.0
    %1357 = vmatprep.subr.mxu0 0.0
    %1358 = vmatpush1.msra.mxu0 0.0
    %1359 = vmatprep.subr.mxu0 0.0
    %1360 = vmatpush1.msra.mxu0 0.0
    %1361 = vmatprep.subr.mxu0 0.0
    %1362 = vmatpush1.msra.mxu0 0.0
    %1363 = vmatprep.subr.mxu0 0.0
    %1364 = vmatpush1.msra.mxu0 0.0
    %1365 = vmatprep.subr.mxu0 0.0
    %1366 = vmatpush1.msra.mxu0 0.0
    %1367 = vmatprep.subr.mxu0 0.0
    %1368 = vmatpush1.msra.mxu0 0.0
    %1369 = vmatprep.subr.mxu0 0.0
    %1370 = vmatpush1.msra.mxu0 0.0
    %1371 = vmatprep.subr.mxu0 0.0
    %1372 = vmatpush1.msra.mxu0 0.0
    %1373 = vmatprep.subr.mxu0 0.0
    %1374 = vmatpush1.msra.mxu0 0.0
    %1375 = vmatprep.subr.mxu0 0.0
    %1376 = vmatpush1.msra.mxu0 0.0
    %1377 = vmatprep.subr.mxu0 0.0
    %1378 = vmatpush1.msra.mxu0 0.0
    %1379 = vmatprep.subr.mxu0 0.0
    %1380 = vmatpush1.msra.mxu0 0.0
    %1381 = vmatprep.subr.mxu0 0.0
    %1382 = vmatpush1.msra.mxu0 0.0
    %1383 = vmatprep.subr.mxu0 0.0
    %1384 = vmatpush1.msra.mxu0 0.0
    %1385 = vmatprep.subr.mxu0 0.0
    %1386 = vmatpush1.msra.mxu0 0.0
    %1387 = vmatprep.subr.mxu0 0.0
    %1388 = vmatpush1.msra.mxu0 0.0
    %1389 = vmatprep.subr.mxu0 0.0
    %1390 = vmatpush1.msra.mxu0 0.0
    %1391 = vmatprep.subr.mxu0 0.0
    %1392 = vmatpush1.msra.mxu0 0.0
    %1393 = vmatprep.subr.mxu0 0.0
    %1394 = vmatpush1.msra.mxu0 0.0
    %1395 = vmatprep.subr.mxu0 0.0
    %1396 = vmatpush1.msra.mxu0 0.0
    %1397 = vmatprep.subr.mxu0 0.0
    %1398 = vmatpush1.msra.mxu0 0.0
    %1399 = vmatprep.subr.mxu0 0.0
    %1400 = vmatpush1.msra.mxu0 0.0
    %1401 = vmatprep.subr.mxu0 0.0
    %1402 = vmatpush1.msra.mxu0 0.0
    %1403 = vmatprep.subr.mxu0 0.0
    %1404 = vmatpush1.msra.mxu0 0.0
    %1405 = vmatprep.subr.mxu0 0.0
    %1406 = vmatpush1.msra.mxu0 0.0
    %1407 = vmatprep.subr.mxu0 0.0
    %1408 = vmatpush1.msra.mxu0 0.0
    %1409 = vmatprep.subr.mxu0 0.0
    %1410 = vmatpush1.msra.mxu0 0.0
    %1411 = vmatprep.subr.mxu0 0.0
    %1412 = vmatpush1.msra.mxu0 0.0
    %1413 = vmatprep.mubr.f32.mxu0 0.0
    %1414 = vmatmul.mubr.f32.gmra.mrb[0].mxu0 %v1344
    %v1415 = vpop.f32.mrb[0].mxu0
    %v1416 = vadd.f32 0.0, %v1415
    %v1417 = vpop.f32.mrb[0].mxu0
    %1418 = vdwg.mxu0
    %v1419 = vadd.f32 %v1308, %v1416
    %v1420 = vxor.u32 %v1419, 2147483648
    %v1421 = vmul.f32 %v1420, 1.442695
    %v1422 = vpow.pop %v1421
    %v1423 = vadd.f32 %v1422, 1.0
    %v1424 = vrcp.pop %v1423
    %v1425 = vmul.f32 1.0, %v1424
    %v1426 = vtanh.pop %v1419
    %v1427 = vmul.f32 %v1425, 0.0
    %1429 = vrot.lane.b32.xlu0 %v1426, 104
    %v1430 = vpop.permute.xlu0 %1429
    %v1432 = vmul.f32 %v1425, %v1430
    %1434 = vrot.lane.b32.xlu0 %v1432, 12
    %v1435 = vpop.permute.xlu0 %1434
    %v1437 = vadd.f32 %v1427, %v1435
    %v1438 = vtanh.pop %v1437
    %1440 = vrot.lane.b32.xlu0 %v1438, 24
    %v1441 = vpop.permute.xlu0 %1440
    %v1443 = vmul.f32 %v1425, %v1441
    %1445 = vrot.lane.b32.xlu0 %v1443, 92
    %v1446 = vpop.permute.xlu0 %1445
    %v1447 = vsel %vm1216, %v1446, 0
    %1449 = vmatprep.subr.mxu0 0.0
    %1450 = vmatpush1.msra.mxu0 %v1341
    %1451 = vmatprep.subr.mxu0 0.0
    %1452 = vmatpush1.msra.mxu0 %v1347
    %1453 = vmatprep.subr.mxu0 0.0
    %1454 = vmatpush1.msra.mxu0 0.0
    %1455 = vmatprep.subr.mxu0 0.0
    %1456 = vmatpush1.msra.mxu0 0.0
    %1457 = vmatprep.subr.mxu0 0.0
    %1458 = vmatpush1.msra.mxu0 0.0
    %1459 = vmatprep.subr.mxu0 0.0
    %1460 = vmatpush1.msra.mxu0 0.0
    %1461 = vmatprep.subr.mxu0 0.0
    %1462 = vmatpush1.msra.mxu0 0.0
    %1463 = vmatprep.subr.mxu0 0.0
    %1464 = vmatpush1.msra.mxu0 0.0
    %1465 = vmatprep.subr.mxu0 0.0
    %1466 = vmatpush1.msra.mxu0 0.0
    %1467 = vmatprep.subr.mxu0 0.0
    %1468 = vmatpush1.msra.mxu0 0.0
    %1469 = vmatprep.subr.mxu0 0.0
    %1470 = vmatpush1.msra.mxu0 0.0
    %1471 = vmatprep.subr.mxu0 0.0
    %1472 = vmatpush1.msra.mxu0 0.0
    %1473 = vmatprep.subr.mxu0 0.0
    %1474 = vmatpush1.msra.mxu0 0.0
    %1475 = vmatprep.subr.mxu0 0.0
    %1476 = vmatpush1.msra.mxu0 0.0
    %1477 = vmatprep.subr.mxu0 0.0
    %1478 = vmatpush1.msra.mxu0 0.0
    %1479 = vmatprep.subr.mxu0 0.0
    %1480 = vmatpush1.msra.mxu0 0.0
    %1481 = vmatprep.subr.mxu0 0.0
    %1482 = vmatpush1.msra.mxu0 0.0
    %1483 = vmatprep.subr.mxu0 0.0
    %1484 = vmatpush1.msra.mxu0 0.0
    %1485 = vmatprep.subr.mxu0 0.0
    %1486 = vmatpush1.msra.mxu0 0.0
    %1487 = vmatprep.subr.mxu0 0.0
    %1488 = vmatpush1.msra.mxu0 0.0
    %1489 = vmatprep.subr.mxu0 0.0
    %1490 = vmatpush1.msra.mxu0 0.0
    %1491 = vmatprep.subr.mxu0 0.0
    %1492 = vmatpush1.msra.mxu0 0.0
    %1493 = vmatprep.subr.mxu0 0.0
    %1494 = vmatpush1.msra.mxu0 0.0
    %1495 = vmatprep.subr.mxu0 0.0
    %1496 = vmatpush1.msra.mxu0 0.0
    %1497 = vmatprep.subr.mxu0 0.0
    %1498 = vmatpush1.msra.mxu0 0.0
    %1499 = vmatprep.subr.mxu0 0.0
    %1500 = vmatpush1.msra.mxu0 0.0
    %1501 = vmatprep.subr.mxu0 0.0
    %1502 = vmatpush1.msra.mxu0 0.0
    %1503 = vmatprep.subr.mxu0 0.0
    %1504 = vmatpush1.msra.mxu0 0.0
    %1505 = vmatprep.subr.mxu0 0.0
    %1506 = vmatpush1.msra.mxu0 0.0
    %1507 = vmatprep.subr.mxu0 0.0
    %1508 = vmatpush1.msra.mxu0 0.0
    %1509 = vmatprep.subr.mxu0 0.0
    %1510 = vmatpush1.msra.mxu0 0.0
    %1511 = vmatprep.subr.mxu0 0.0
    %1512 = vmatpush1.msra.mxu0 0.0
    %1513 = vmatprep.mubr.f32.mxu0 0.0
    %1514 = vmatmul.mubr.f32.gmra.mrb[0].mxu0 %v1447
    %v1515 = vpop.f32.mrb[0].mxu0
    %v1516 = vadd.f32 0.0, %v1515
    %v1517 = vpop.f32.mrb[0].mxu0
    %1518 = vdwg.mxu0
    %v1519 = vadd.f32 %v1313, %v1516
    %v1520 = vxor.u32 %v1519, 2147483648
    %v1521 = vmul.f32 %v1520, 1.442695
    %v1522 = vpow.pop %v1521
    %v1523 = vadd.f32 %v1522, 1.0
    %v1524 = vrcp.pop %v1523
    %v1525 = vmul.f32 1.0, %v1524
    %v1526 = vtanh.pop %v1519
    %v1527 = vmul.f32 %v1525, %v1437
    %1529 = vrot.lane.b32.xlu0 %v1526, 104
    %v1530 = vpop.permute.xlu0 %1529
    %v1532 = vmul.f32 %v1525, %v1530
    %1534 = vrot.lane.b32.xlu0 %v1532, 12
    %v1535 = vpop.permute.xlu0 %1534
    %v1537 = vadd.f32 %v1527, %v1535
    %v1538 = vtanh.pop %v1537
    %1540 = vrot.lane.b32.xlu0 %v1538, 24
    %v1541 = vpop.permute.xlu0 %1540
    %v1543 = vmul.f32 %v1525, %v1541
    %1545 = vrot.lane.b32.xlu0 %v1543, 92
    %v1546 = vpop.permute.xlu0 %1545
    %v1547 = vsel %vm1216, %v1546, 0
    %1549 = vmatprep.subr.mxu0 0.0
    %1550 = vmatpush1.msra.mxu0 %v1341
    %1551 = vmatprep.subr.mxu0 0.0
    %1552 = vmatpush1.msra.mxu0 %v1347
    %1553 = vmatprep.subr.mxu0 0.0
    %1554 = vmatpush1.msra.mxu0 0.0
    %1555 = vmatprep.subr.mxu0 0.0
    %1556 = vmatpush1.msra.mxu0 0.0
    %1557 = vmatprep.subr.mxu0 0.0
    %1558 = vmatpush1.msra.mxu0 0.0
    %1559 = vmatprep.subr.mxu0 0.0
    %1560 = vmatpush1.msra.mxu0 0.0
    %1561 = vmatprep.subr.mxu0 0.0
    %1562 = vmatpush1.msra.mxu0 0.0
    %1563 = vmatprep.subr.mxu0 0.0
    %1564 = vmatpush1.msra.mxu0 0.0
    %1565 = vmatprep.subr.mxu0 0.0
    %1566 = vmatpush1.msra.mxu0 0.0
    %1567 = vmatprep.subr.mxu0 0.0
    %1568 = vmatpush1.msra.mxu0 0.0
    %1569 = vmatprep.subr.mxu0 0.0
    %1570 = vmatpush1.msra.mxu0 0.0
    %1571 = vmatprep.subr.mxu0 0.0
    %1572 = vmatpush1.msra.mxu0 0.0
    %1573 = vmatprep.subr.mxu0 0.0
    %1574 = vmatpush1.msra.mxu0 0.0
    %1575 = vmatprep.subr.mxu0 0.0
    %1576 = vmatpush1.msra.mxu0 0.0
    %1577 = vmatprep.subr.mxu0 0.0
    %1578 = vmatpush1.msra.mxu0 0.0
    %1579 = vmatprep.subr.mxu0 0.0
    %1580 = vmatpush1.msra.mxu0 0.0
    %1581 = vmatprep.subr.mxu0 0.0
    %1582 = vmatpush1.msra.mxu0 0.0
    %1583 = vmatprep.subr.mxu0 0.0
    %1584 = vmatpush1.msra.mxu0 0.0
    %1585 = vmatprep.subr.mxu0 0.0
    %1586 = vmatpush1.msra.mxu0 0.0
    %1587 = vmatprep.subr.mxu0 0.0
    %1588 = vmatpush1.msra.mxu0 0.0
    %1589 = vmatprep.subr.mxu0 0.0
    %1590 = vmatpush1.msra.mxu0 0.0
    %1591 = vmatprep.subr.mxu0 0.0
    %1592 = vmatpush1.msra.mxu0 0.0
    %1593 = vmatprep.subr.mxu0 0.0
    %1594 = vmatpush1.msra.mxu0 0.0
    %1595 = vmatprep.subr.mxu0 0.0
    %1596 = vmatpush1.msra.mxu0 0.0
    %1597 = vmatprep.subr.mxu0 0.0
    %1598 = vmatpush1.msra.mxu0 0.0
    %1599 = vmatprep.subr.mxu0 0.0
    %1600 = vmatpush1.msra.mxu0 0.0
    %1601 = vmatprep.subr.mxu0 0.0
    %1602 = vmatpush1.msra.mxu0 0.0
    %1603 = vmatprep.subr.mxu0 0.0
    %1604 = vmatpush1.msra.mxu0 0.0
    %1605 = vmatprep.subr.mxu0 0.0
    %1606 = vmatpush1.msra.mxu0 0.0
    %1607 = vmatprep.subr.mxu0 0.0
    %1608 = vmatpush1.msra.mxu0 0.0
    %1609 = vmatprep.subr.mxu0 0.0
    %1610 = vmatpush1.msra.mxu0 0.0
    %1611 = vmatprep.subr.mxu0 0.0
    %1612 = vmatpush1.msra.mxu0 0.0
    %1613 = vmatprep.mubr.f32.mxu0 0.0
    %1614 = vmatmul.mubr.f32.gmra.mrb[0].mxu0 %v1547
    %v1615 = vpop.f32.mrb[0].mxu0
    %v1616 = vadd.f32 0.0, %v1615
    %v1617 = vpop.f32.mrb[0].mxu0
    %1618 = vdwg.mxu0
    %v1619 = vadd.f32 %v1318, %v1616
    %v1620 = vxor.u32 %v1619, 2147483648
    %v1621 = vmul.f32 %v1620, 1.442695
    %v1622 = vpow.pop %v1621
    %v1623 = vadd.f32 %v1622, 1.0
    %v1624 = vrcp.pop %v1623
    %v1625 = vmul.f32 1.0, %v1624
    %v1626 = vtanh.pop %v1619
    %v1627 = vmul.f32 %v1625, %v1537
    %1629 = vrot.lane.b32.xlu0 %v1626, 104
    %v1630 = vpop.permute.xlu0 %1629
    %v1632 = vmul.f32 %v1625, %v1630
    %1634 = vrot.lane.b32.xlu0 %v1632, 12
    %v1635 = vpop.permute.xlu0 %1634
    %v1637 = vadd.f32 %v1627, %v1635
    %v1638 = vtanh.pop %v1637
    %1640 = vrot.lane.b32.xlu0 %v1638, 24
    %v1641 = vpop.permute.xlu0 %1640
    %v1643 = vmul.f32 %v1625, %v1641
    %1645 = vrot.lane.b32.xlu0 %v1643, 92
    %v1646 = vpop.permute.xlu0 %1645
    %v1647 = vsel %vm1216, %v1646, 0
    %1649 = vmatprep.subr.mxu0 0.0
    %1650 = vmatpush1.msra.mxu0 %v1341
    %1651 = vmatprep.subr.mxu0 0.0
    %1652 = vmatpush1.msra.mxu0 %v1347
    %1653 = vmatprep.subr.mxu0 0.0
    %1654 = vmatpush1.msra.mxu0 0.0
    %1655 = vmatprep.subr.mxu0 0.0
    %1656 = vmatpush1.msra.mxu0 0.0
    %1657 = vmatprep.subr.mxu0 0.0
    %1658 = vmatpush1.msra.mxu0 0.0
    %1659 = vmatprep.subr.mxu0 0.0
    %1660 = vmatpush1.msra.mxu0 0.0
    %1661 = vmatprep.subr.mxu0 0.0
    %1662 = vmatpush1.msra.mxu0 0.0
    %1663 = vmatprep.subr.mxu0 0.0
    %1664 = vmatpush1.msra.mxu0 0.0
    %1665 = vmatprep.subr.mxu0 0.0
    %1666 = vmatpush1.msra.mxu0 0.0
    %1667 = vmatprep.subr.mxu0 0.0
    %1668 = vmatpush1.msra.mxu0 0.0
    %1669 = vmatprep.subr.mxu0 0.0
    %1670 = vmatpush1.msra.mxu0 0.0
    %1671 = vmatprep.subr.mxu0 0.0
    %1672 = vmatpush1.msra.mxu0 0.0
    %1673 = vmatprep.subr.mxu0 0.0
    %1674 = vmatpush1.msra.mxu0 0.0
    %1675 = vmatprep.subr.mxu0 0.0
    %1676 = vmatpush1.msra.mxu0 0.0
    %1677 = vmatprep.subr.mxu0 0.0
    %1678 = vmatpush1.msra.mxu0 0.0
    %1679 = vmatprep.subr.mxu0 0.0
    %1680 = vmatpush1.msra.mxu0 0.0
    %1681 = vmatprep.subr.mxu0 0.0
    %1682 = vmatpush1.msra.mxu0 0.0
    %1683 = vmatprep.subr.mxu0 0.0
    %1684 = vmatpush1.msra.mxu0 0.0
    %1685 = vmatprep.subr.mxu0 0.0
    %1686 = vmatpush1.msra.mxu0 0.0
    %1687 = vmatprep.subr.mxu0 0.0
    %1688 = vmatpush1.msra.mxu0 0.0
    %1689 = vmatprep.subr.mxu0 0.0
    %1690 = vmatpush1.msra.mxu0 0.0
    %1691 = vmatprep.subr.mxu0 0.0
    %1692 = vmatpush1.msra.mxu0 0.0
    %1693 = vmatprep.subr.mxu0 0.0
    %1694 = vmatpush1.msra.mxu0 0.0
    %1695 = vmatprep.subr.mxu0 0.0
    %1696 = vmatpush1.msra.mxu0 0.0
    %1697 = vmatprep.subr.mxu0 0.0
    %1698 = vmatpush1.msra.mxu0 0.0
    %1699 = vmatprep.subr.mxu0 0.0
    %1700 = vmatpush1.msra.mxu0 0.0
    %1701 = vmatprep.subr.mxu0 0.0
    %1702 = vmatpush1.msra.mxu0 0.0
    %1703 = vmatprep.subr.mxu0 0.0
    %1704 = vmatpush1.msra.mxu0 0.0
    %1705 = vmatprep.subr.mxu0 0.0
    %1706 = vmatpush1.msra.mxu0 0.0
    %1707 = vmatprep.subr.mxu0 0.0
    %1708 = vmatpush1.msra.mxu0 0.0
    %1709 = vmatprep.subr.mxu0 0.0
    %1710 = vmatpush1.msra.mxu0 0.0
    %1711 = vmatprep.subr.mxu0 0.0
    %1712 = vmatpush1.msra.mxu0 0.0
    %1713 = vmatprep.mubr.f32.mxu0 0.0
    %1714 = vmatmul.mubr.f32.gmra.mrb[0].mxu0 %v1647
    %v1715 = vpop.f32.mrb[0].mxu0
    %v1716 = vadd.f32 0.0, %v1715
    %v1717 = vpop.f32.mrb[0].mxu0
    %1718 = vdwg.mxu0
    %v1719 = vadd.f32 %v1323, %v1716
    %v1720 = vxor.u32 %v1719, 2147483648
    %v1721 = vmul.f32 %v1720, 1.442695
    %v1722 = vpow.pop %v1721
    %v1723 = vadd.f32 %v1722, 1.0
    %v1724 = vrcp.pop %v1723
    %v1725 = vmul.f32 1.0, %v1724
    %v1726 = vtanh.pop %v1719
    %v1727 = vmul.f32 %v1725, %v1637
    %1729 = vrot.lane.b32.xlu0 %v1726, 104
    %v1730 = vpop.permute.xlu0 %1729
    %v1732 = vmul.f32 %v1725, %v1730
    %1734 = vrot.lane.b32.xlu0 %v1732, 12
    %v1735 = vpop.permute.xlu0 %1734
    %v1737 = vadd.f32 %v1727, %v1735
    %v1738 = vtanh.pop %v1737
    %1740 = vrot.lane.b32.xlu0 %v1738, 24
    %v1741 = vpop.permute.xlu0 %1740
    %v1743 = vmul.f32 %v1725, %v1741
    %1745 = vrot.lane.b32.xlu0 %v1743, 92
    %v1746 = vpop.permute.xlu0 %1745
    %v1747 = vsel %vm1216, %v1746, 0
    %1749 = vmatprep.subr.mxu0 0.0
    %1750 = vmatpush1.msra.mxu0 %v1341
    %1751 = vmatprep.subr.mxu0 0.0
    %1752 = vmatpush1.msra.mxu0 %v1347
    %1753 = vmatprep.subr.mxu0 0.0
    %1754 = vmatpush1.msra.mxu0 0.0
    %1755 = vmatprep.subr.mxu0 0.0
    %1756 = vmatpush1.msra.mxu0 0.0
    %1757 = vmatprep.subr.mxu0 0.0
    %1758 = vmatpush1.msra.mxu0 0.0
    %1759 = vmatprep.subr.mxu0 0.0
    %1760 = vmatpush1.msra.mxu0 0.0
    %1761 = vmatprep.subr.mxu0 0.0
    %1762 = vmatpush1.msra.mxu0 0.0
    %1763 = vmatprep.subr.mxu0 0.0
    %1764 = vmatpush1.msra.mxu0 0.0
    %1765 = vmatprep.subr.mxu0 0.0
    %1766 = vmatpush1.msra.mxu0 0.0
    %1767 = vmatprep.subr.mxu0 0.0
    %1768 = vmatpush1.msra.mxu0 0.0
    %1769 = vmatprep.subr.mxu0 0.0
    %1770 = vmatpush1.msra.mxu0 0.0
    %1771 = vmatprep.subr.mxu0 0.0
    %1772 = vmatpush1.msra.mxu0 0.0
    %1773 = vmatprep.subr.mxu0 0.0
    %1774 = vmatpush1.msra.mxu0 0.0
    %1775 = vmatprep.subr.mxu0 0.0
    %1776 = vmatpush1.msra.mxu0 0.0
    %1777 = vmatprep.subr.mxu0 0.0
    %1778 = vmatpush1.msra.mxu0 0.0
    %1779 = vmatprep.subr.mxu0 0.0
    %1780 = vmatpush1.msra.mxu0 0.0
    %1781 = vmatprep.subr.mxu0 0.0
    %1782 = vmatpush1.msra.mxu0 0.0
    %1783 = vmatprep.subr.mxu0 0.0
    %1784 = vmatpush1.msra.mxu0 0.0
    %1785 = vmatprep.subr.mxu0 0.0
    %1786 = vmatpush1.msra.mxu0 0.0
    %1787 = vmatprep.subr.mxu0 0.0
    %1788 = vmatpush1.msra.mxu0 0.0
    %1789 = vmatprep.subr.mxu0 0.0
    %1790 = vmatpush1.msra.mxu0 0.0
    %1791 = vmatprep.subr.mxu0 0.0
    %1792 = vmatpush1.msra.mxu0 0.0
    %1793 = vmatprep.subr.mxu0 0.0
    %1794 = vmatpush1.msra.mxu0 0.0
    %1795 = vmatprep.subr.mxu0 0.0
    %1796 = vmatpush1.msra.mxu0 0.0
    %1797 = vmatprep.subr.mxu0 0.0
    %1798 = vmatpush1.msra.mxu0 0.0
    %1799 = vmatprep.subr.mxu0 0.0
    %1800 = vmatpush1.msra.mxu0 0.0
    %1801 = vmatprep.subr.mxu0 0.0
    %1802 = vmatpush1.msra.mxu0 0.0
    %1803 = vmatprep.subr.mxu0 0.0
    %1804 = vmatpush1.msra.mxu0 0.0
    %1805 = vmatprep.subr.mxu0 0.0
    %1806 = vmatpush1.msra.mxu0 0.0
    %1807 = vmatprep.subr.mxu0 0.0
    %1808 = vmatpush1.msra.mxu0 0.0
    %1809 = vmatprep.subr.mxu0 0.0
    %1810 = vmatpush1.msra.mxu0 0.0
    %1811 = vmatprep.subr.mxu0 0.0
    %1812 = vmatpush1.msra.mxu0 0.0
    %1813 = vmatprep.mubr.f32.mxu0 0.0
    %1814 = vmatmul.mubr.f32.gmra.mrb[0].mxu0 %v1747
    %v1815 = vpop.f32.mrb[0].mxu0
    %v1816 = vadd.f32 0.0, %v1815
    %v1817 = vpop.f32.mrb[0].mxu0
    %1818 = vdwg.mxu0
    %v1819 = vadd.f32 %v1328, %v1816
    %v1820 = vxor.u32 %v1819, 2147483648
    %v1821 = vmul.f32 %v1820, 1.442695
    %v1822 = vpow.pop %v1821
    %v1823 = vadd.f32 %v1822, 1.0
    %v1824 = vrcp.pop %v1823
    %v1825 = vmul.f32 1.0, %v1824
    %v1826 = vtanh.pop %v1819
    %v1827 = vmul.f32 %v1825, %v1737
    %1829 = vrot.lane.b32.xlu0 %v1826, 104
    %v1830 = vpop.permute.xlu0 %1829
    %v1832 = vmul.f32 %v1825, %v1830
    %1834 = vrot.lane.b32.xlu0 %v1832, 12
    %v1835 = vpop.permute.xlu0 %1834
    %v1837 = vadd.f32 %v1827, %v1835
    %v1838 = vtanh.pop %v1837
    %1840 = vrot.lane.b32.xlu0 %v1838, 24
    %v1841 = vpop.permute.xlu0 %1840
    %v1843 = vmul.f32 %v1825, %v1841
    %1845 = vrot.lane.b32.xlu0 %v1843, 92
    %v1846 = vpop.permute.xlu0 %1845
    %v1847 = vsel %vm1216, %v1846, 0
    %1849 = vmatprep.subr.mxu0 0.0
    %1850 = vmatpush1.msra.mxu0 %v1341
    %1851 = vmatprep.subr.mxu0 0.0
    %1852 = vmatpush1.msra.mxu0 %v1347
    %1853 = vmatprep.subr.mxu0 0.0
    %1854 = vmatpush1.msra.mxu0 0.0
    %1855 = vmatprep.subr.mxu0 0.0
    %1856 = vmatpush1.msra.mxu0 0.0
    %1857 = vmatprep.subr.mxu0 0.0
    %1858 = vmatpush1.msra.mxu0 0.0
    %1859 = vmatprep.subr.mxu0 0.0
    %1860 = vmatpush1.msra.mxu0 0.0
    %1861 = vmatprep.subr.mxu0 0.0
    %1862 = vmatpush1.msra.mxu0 0.0
    %1863 = vmatprep.subr.mxu0 0.0
    %1864 = vmatpush1.msra.mxu0 0.0
    %1865 = vmatprep.subr.mxu0 0.0
    %1866 = vmatpush1.msra.mxu0 0.0
    %1867 = vmatprep.subr.mxu0 0.0
    %1868 = vmatpush1.msra.mxu0 0.0
    %1869 = vmatprep.subr.mxu0 0.0
    %1870 = vmatpush1.msra.mxu0 0.0
    %1871 = vmatprep.subr.mxu0 0.0
    %1872 = vmatpush1.msra.mxu0 0.0
    %1873 = vmatprep.subr.mxu0 0.0
    %1874 = vmatpush1.msra.mxu0 0.0
    %1875 = vmatprep.subr.mxu0 0.0
    %1876 = vmatpush1.msra.mxu0 0.0
    %1877 = vmatprep.subr.mxu0 0.0
    %1878 = vmatpush1.msra.mxu0 0.0
    %1879 = vmatprep.subr.mxu0 0.0
    %1880 = vmatpush1.msra.mxu0 0.0
    %1881 = vmatprep.subr.mxu0 0.0
    %1882 = vmatpush1.msra.mxu0 0.0
    %1883 = vmatprep.subr.mxu0 0.0
    %1884 = vmatpush1.msra.mxu0 0.0
    %1885 = vmatprep.subr.mxu0 0.0
    %1886 = vmatpush1.msra.mxu0 0.0
    %1887 = vmatprep.subr.mxu0 0.0
    %1888 = vmatpush1.msra.mxu0 0.0
    %1889 = vmatprep.subr.mxu0 0.0
    %1890 = vmatpush1.msra.mxu0 0.0
    %1891 = vmatprep.subr.mxu0 0.0
    %1892 = vmatpush1.msra.mxu0 0.0
    %1893 = vmatprep.subr.mxu0 0.0
    %1894 = vmatpush1.msra.mxu0 0.0
    %1895 = vmatprep.subr.mxu0 0.0
    %1896 = vmatpush1.msra.mxu0 0.0
    %1897 = vmatprep.subr.mxu0 0.0
    %1898 = vmatpush1.msra.mxu0 0.0
    %1899 = vmatprep.subr.mxu0 0.0
    %1900 = vmatpush1.msra.mxu0 0.0
    %1901 = vmatprep.subr.mxu0 0.0
    %1902 = vmatpush1.msra.mxu0 0.0
    %1903 = vmatprep.subr.mxu0 0.0
    %1904 = vmatpush1.msra.mxu0 0.0
    %1905 = vmatprep.subr.mxu0 0.0
    %1906 = vmatpush1.msra.mxu0 0.0
    %1907 = vmatprep.subr.mxu0 0.0
    %1908 = vmatpush1.msra.mxu0 0.0
    %1909 = vmatprep.subr.mxu0 0.0
    %1910 = vmatpush1.msra.mxu0 0.0
    %1911 = vmatprep.subr.mxu0 0.0
    %1912 = vmatpush1.msra.mxu0 0.0
    %1913 = vmatprep.mubr.f32.mxu0 0.0
    %1914 = vmatmul.mubr.f32.gmra.mrb[0].mxu0 %v1847
    %v1915 = vpop.f32.mrb[0].mxu0
    %v1916 = vadd.f32 0.0, %v1915
    %v1917 = vpop.f32.mrb[0].mxu0
    %1918 = vdwg.mxu0
    %v1919 = vadd.f32 %v1333, %v1916
    %v1920 = vxor.u32 %v1919, 2147483648
    %v1921 = vmul.f32 %v1920, 1.442695
    %v1922 = vpow.pop %v1921
    %v1923 = vadd.f32 %v1922, 1.0
    %v1924 = vrcp.pop %v1923
    %v1925 = vmul.f32 1.0, %v1924
    %v1926 = vtanh.pop %v1919
    %v1927 = vmul.f32 %v1925, %v1837
    %1929 = vrot.lane.b32.xlu0 %v1926, 104
    %v1930 = vpop.permute.xlu0 %1929
    %v1932 = vmul.f32 %v1925, %v1930
    %1934 = vrot.lane.b32.xlu0 %v1932, 12
    %v1935 = vpop.permute.xlu0 %1934
    %v1937 = vadd.f32 %v1927, %v1935
    %v1938 = vtanh.pop %v1937
    %1940 = vrot.lane.b32.xlu0 %v1938, 24
    %v1941 = vpop.permute.xlu0 %1940
    %v1943 = vmul.f32 %v1925, %v1941
    %1945 = vrot.lane.b32.xlu0 %v1943, 92
    %v1946 = vpop.permute.xlu0 %1945
    %v1947 = vsel %vm1216, %v1946, 0
    %1949 = vmatprep.subr.mxu0 0.0
    %1950 = vmatpush1.msra.mxu0 %v1341
    %1951 = vmatprep.subr.mxu0 0.0
    %1952 = vmatpush1.msra.mxu0 %v1347
    %1953 = vmatprep.subr.mxu0 0.0
    %1954 = vmatpush1.msra.mxu0 0.0
    %1955 = vmatprep.subr.mxu0 0.0
    %1956 = vmatpush1.msra.mxu0 0.0
    %1957 = vmatprep.subr.mxu0 0.0
    %1958 = vmatpush1.msra.mxu0 0.0
    %1959 = vmatprep.subr.mxu0 0.0
    %1960 = vmatpush1.msra.mxu0 0.0
    %1961 = vmatprep.subr.mxu0 0.0
    %1962 = vmatpush1.msra.mxu0 0.0
    %1963 = vmatprep.subr.mxu0 0.0
    %1964 = vmatpush1.msra.mxu0 0.0
    %1965 = vmatprep.subr.mxu0 0.0
    %1966 = vmatpush1.msra.mxu0 0.0
    %1967 = vmatprep.subr.mxu0 0.0
    %1968 = vmatpush1.msra.mxu0 0.0
    %1969 = vmatprep.subr.mxu0 0.0
    %1970 = vmatpush1.msra.mxu0 0.0
    %1971 = vmatprep.subr.mxu0 0.0
    %1972 = vmatpush1.msra.mxu0 0.0
    %1973 = vmatprep.subr.mxu0 0.0
    %1974 = vmatpush1.msra.mxu0 0.0
    %1975 = vmatprep.subr.mxu0 0.0
    %1976 = vmatpush1.msra.mxu0 0.0
    %1977 = vmatprep.subr.mxu0 0.0
    %1978 = vmatpush1.msra.mxu0 0.0
    %1979 = vmatprep.subr.mxu0 0.0
    %1980 = vmatpush1.msra.mxu0 0.0
    %1981 = vmatprep.subr.mxu0 0.0
    %1982 = vmatpush1.msra.mxu0 0.0
    %1983 = vmatprep.subr.mxu0 0.0
    %1984 = vmatpush1.msra.mxu0 0.0
    %1985 = vmatprep.subr.mxu0 0.0
    %1986 = vmatpush1.msra.mxu0 0.0
    %1987 = vmatprep.subr.mxu0 0.0
    %1988 = vmatpush1.msra.mxu0 0.0
    %1989 = vmatprep.subr.mxu0 0.0
    %1990 = vmatpush1.msra.mxu0 0.0
    %1991 = vmatprep.subr.mxu0 0.0
    %1992 = vmatpush1.msra.mxu0 0.0
    %1993 = vmatprep.subr.mxu0 0.0
    %1994 = vmatpush1.msra.mxu0 0.0
    %1995 = vmatprep.subr.mxu0 0.0
    %1996 = vmatpush1.msra.mxu0 0.0
    %1997 = vmatprep.subr.mxu0 0.0
    %1998 = vmatpush1.msra.mxu0 0.0
    %1999 = vmatprep.subr.mxu0 0.0
    %2000 = vmatpush1.msra.mxu0 0.0
    %2001 = vmatprep.subr.mxu0 0.0
    %2002 = vmatpush1.msra.mxu0 0.0
    %2003 = vmatprep.subr.mxu0 0.0
    %2004 = vmatpush1.msra.mxu0 0.0
    %2005 = vmatprep.subr.mxu0 0.0
    %2006 = vmatpush1.msra.mxu0 0.0
    %2007 = vmatprep.subr.mxu0 0.0
    %2008 = vmatpush1.msra.mxu0 0.0
    %2009 = vmatprep.subr.mxu0 0.0
    %2010 = vmatpush1.msra.mxu0 0.0
    %2011 = vmatprep.subr.mxu0 0.0
    %2012 = vmatpush1.msra.mxu0 0.0
    %2013 = vmatprep.mubr.f32.mxu0 0.0
    %2014 = vmatmul.mubr.f32.gmra.mrb[0].mxu0 %v1947
    %v2015 = vpop.f32.mrb[0].mxu0
    %v2016 = vadd.f32 0.0, %v2015
    %v2017 = vpop.f32.mrb[0].mxu0
    %2018 = vdwg.mxu0
    %v2019 = vadd.f32 %v1338, %v2016
    %v2020 = vxor.u32 %v2019, 2147483648
    %v2021 = vmul.f32 %v2020, 1.442695
    %v2022 = vpow.pop %v2021
    %v2023 = vadd.f32 %v2022, 1.0
    %v2024 = vrcp.pop %v2023
    %v2025 = vmul.f32 1.0, %v2024
    %v2026 = vtanh.pop %v2019
    %v2027 = vmul.f32 %v2025, %v1937
    %2029 = vrot.lane.b32.xlu0 %v2026, 104
    %v2030 = vpop.permute.xlu0 %2029
    %v2032 = vmul.f32 %v2025, %v2030
    %2034 = vrot.lane.b32.xlu0 %v2032, 12
    %v2035 = vpop.permute.xlu0 %2034
    %v2037 = vadd.f32 %v2027, %v2035
    %v2038 = vtanh.pop %v2037
    %2040 = vrot.lane.b32.xlu0 %v2038, 24
    %v2041 = vpop.permute.xlu0 %2040
    %v2043 = vmul.f32 %v2025, %v2041
    %2045 = vrot.lane.b32.xlu0 %v2043, 92
    %v2046 = vpop.permute.xlu0 %2045
    %2048 = vst.msk [vmem:[#allocation2] sm:$0xff] %vm1216, %v2046
    // Predicated region
    $region26: #{tpu_custom_call.1} parent=1 // pred_check
      _
    $region27: #{tpu_custom_call.1} parent=1 // pred_check_branch
      %2050 = sbr.rel (0) target = $region29
    $region28: #{tpu_custom_call.1} parent=1 // pred_region
      %s2052 = ssub.s32 128, 128
      %2053 = vsyncadd [#allocation3], %s2052
      %s2055 = sshll.u32 [#allocation2], 4
      %s2056 = int_to_ptr.vmem [resolvable:$true] %s2055
      %2058 = dma.vmem_to_hbm [thread:$0]  %s2056, 128, %s6, [#allocation3]
    $region29: #{tpu_custom_call.1} parent=1 // pred_fallthru
      _
    // Predicated region
    $region30: #{tpu_custom_call.1} parent=1 // pred_check
      _
    $region31: #{tpu_custom_call.1} parent=1 // pred_check_branch
      %2060 = sbr.rel (0) target = $region33
    $region32: #{tpu_custom_call.1} parent=1 // pred_region
      %2061 = dma.done [#allocation3], 128
    $region33: #{tpu_custom_call.1} parent=1 // pred_fallthru
      _
    %2062 = vsyncpa [#allocation3], 1

</llo_original>
